<compile_context>
chip_gen: v7x
topology: tpu7x:2x2x1
jax: 0.10.0
libtpu: 0.0.40
codegen_flags: <defaults>
</compile_context>

<pallas_src>
import math

import jax
import jax.numpy as jnp
from jax.experimental import pallas as pl
from jax.experimental.pallas import tpu as pltpu

LN_EPS = 1e-5  # PyTorch nn.LayerNorm default


# ---------------------------------------------------------------------------
# Helpers
# ---------------------------------------------------------------------------
def _round_up(n, m):
    return ((n + m - 1) // m) * m


def _init_linear_raw(key, in_f, out_f):
    """PyTorch-style uniform init. Returns (W[in,out], b[out])."""
    kw, kb = jax.random.split(key)
    bound = 1.0 / math.sqrt(in_f)
    w = jax.random.uniform(kw, (in_f, out_f), jnp.float32, -bound, bound)
    b = jax.random.uniform(kb, (out_f,), jnp.float32, -bound, bound)
    return w, b


def _pad_w(w, in_pad, out_pad):
    return jnp.zeros((in_pad, out_pad), jnp.float32).at[: w.shape[0], : w.shape[1]].set(w)


def _pack_bgb(bias, gamma, beta, out_pad):
    """Pack bias / gamma / beta into one (3, out_pad) array (padded lanes = 0)."""
    pk = jnp.zeros((3, out_pad), jnp.float32)
    pk = pk.at[0, : bias.shape[0]].set(bias)
    pk = pk.at[1, : gamma.shape[0]].set(gamma)
    pk = pk.at[2, : beta.shape[0]].set(beta)
    return pk


# ---------------------------------------------------------------------------
# Fused encoder kernel (generated from the static block structure)
# ---------------------------------------------------------------------------
def _make_fused_encoder_kernel(block_descs, ln_dim):
    """block_descs: tuple of (num_linear_relu_ln_layers, has_shortcut).

    Param refs are consumed in order:
      for each block:   [W, packed(b,gamma,beta)] * n_layers, then [W_sc, b_sc] if shortcut
      finally:          [W_head(merged mu|logvar), b_head]
    """
    inv_n = 1.0 / float(ln_dim)

    def kernel(*refs):
        x_ref = refs[0]
        o_ref = refs[-1]
        params = refs[1:-1]

        x = x_ref[...]  # (TB, in_pad) — stays in VMEM/vregs for the whole net
        idx = 0
        for n_layers, has_shortcut in block_descs:
            x_in = x
            h = x_in
            for _ in range(n_layers):
                w = params[idx][...]
                pk = params[idx + 1][...]
                idx += 2
                bias = pk[0:1, :]
                gamma = pk[1:2, :]
                beta = pk[2:3, :]
                # Linear + ReLU (padded lanes of h are exactly 0)
                h = jnp.dot(h, w, preferred_element_type=jnp.float32) + bias
                h = jnp.maximum(h, 0.0)
                # Single-pass LayerNorm over the TRUE feature count (ln_dim).
                s = jnp.sum(h, axis=-1, keepdims=True) * inv_n            # mean
                sq = jnp.sum(h * h, axis=-1, keepdims=True) * inv_n       # E[h^2]
                var = sq - s * s
                inv = jax.lax.rsqrt(var + LN_EPS)                          # EUP
                scale = inv * gamma                                        # folded
                h = h * scale + (beta - s * scale)
            if has_shortcut:
                w_sc = params[idx][...]
                b_sc = params[idx + 1][...]
                idx += 2
                sc = jnp.dot(x_in, w_sc, preferred_element_type=jnp.float32) + b_sc
            else:
                sc = x_in  # nn.Identity
            # fused residual add + ReLU
            x = jnp.maximum(sc + h, 0.0)

        # Merged fc_mu / fc_logvar head — one lane-dense matmul.
        w_head = params[idx][...]
        b_head = params[idx + 1][...]
        o_ref[...] = jnp.dot(x, w_head, preferred_element_type=jnp.float32) + b_head

    return kernel


# ---------------------------------------------------------------------------
# Parameter construction (padded-for-kernel + raw-for-reference)
# ---------------------------------------------------------------------------
def init_res_vae_encoder(key, input_dim, output_dim=2, hidden_dim=200,
                         hidden_layers=(2, 2)):
    in_pad = _round_up(input_dim, 128)
    hid_pad = _round_up(hidden_dim, 128)
    head_pad = _round_up(max(2 * output_dim, 1), 128)

    flat = []        # padded arrays, in kernel consumption order
    descs = []       # (n_linear_relu_ln_layers, has_shortcut) per block
    raw_blocks = []  # unpadded params for the pure-JAX reference

    n_blocks = len(hidden_layers)
    keys = jax.random.split(key, n_blocks + 2)

    for i, repeat in enumerate(hidden_layers):
        in_f = input_dim if i == 0 else hidden_dim
        in_p = in_pad if i == 0 else hid_pad
        n_layers = repeat + 2  # input layer + `repeat` hidden layers + output layer
        layer_keys = jax.random.split(keys[i], n_layers + 1)

        raw_layers = []
        for l in range(n_layers):
            lif, lip = (in_f, in_p) if l == 0 else (hidden_dim, hid_pad)
            w, b = _init_linear_raw(layer_keys[l], lif, hidden_dim)
            gamma = jnp.ones((hidden_dim,), jnp.float32)
            beta = jnp.zeros((hidden_dim,), jnp.float32)
            flat.append(_pad_w(w, lip, hid_pad))
            flat.append(_pack_bgb(b, gamma, beta, hid_pad))
            raw_layers.append((w, b, gamma, beta))

        has_sc = in_f != hidden_dim
        raw_sc = None
        if has_sc:
            w, b = _init_linear_raw(layer_keys[n_layers], in_f, hidden_dim)
            flat.append(_pad_w(w, in_p, hid_pad))
            flat.append(jnp.zeros((1, hid_pad), jnp.float32).at[0, :hidden_dim].set(b))
            raw_sc = (w, b)

        descs.append((n_layers, has_sc))
        raw_blocks.append({"layers": raw_layers, "shortcut": raw_sc})

    # Merged fc_mu | fc_logvar head (zero-padded to 128 lanes).
    w_mu, b_mu = _init_linear_raw(keys[n_blocks], hidden_dim, output_dim)
    w_lv, b_lv = _init_linear_raw(keys[n_blocks + 1], hidden_dim, output_dim)
    w_head = jnp.zeros((hid_pad, head_pad), jnp.float32)
    w_head = w_head.at[:hidden_dim, :output_dim].set(w_mu)
    w_head = w_head.at[:hidden_dim, output_dim:2 * output_dim].set(w_lv)
    b_head = jnp.zeros((1, head_pad), jnp.float32)
    b_head = b_head.at[0, :output_dim].set(b_mu)
    b_head = b_head.at[0, output_dim:2 * output_dim].set(b_lv)
    flat += [w_head, b_head]

    return {
        "flat": tuple(flat),
        "descs": tuple(descs),
        "input_dim": input_dim,
        "output_dim": output_dim,
        "hidden_dim": hidden_dim,
        "in_pad": in_pad,
        "hid_pad": hid_pad,
        "head_pad": head_pad,
        "raw": {"blocks": raw_blocks, "fc_mu": (w_mu, b_mu), "fc_logvar": (w_lv, b_lv)},
    }


# ---------------------------------------------------------------------------
# Forward pass: ONE fused pallas_call for the whole encoder
# ---------------------------------------------------------------------------
def res_vae_encoder_apply(params, x, batch_tile=None):
    B, D = x.shape
    assert D == params["input_dim"]
    in_pad = params["in_pad"]
    head_pad = params["head_pad"]
    out_dim = params["output_dim"]
    flat = params["flat"]

    # Batch tile: multiple of 8 sublanes; cap keeps VMEM use modest even with
    # double buffering (halve further on v7x's 64 MiB VMEM if ever tight).
    if batch_tile is None:
        batch_tile = min(_round_up(B, 8), 256)
    TB = batch_tile
    B_pad = _round_up(max(B, TB), TB)

    # Zero-pad batch rows and feature lanes (padded lanes stay 0 in-kernel).
    x_p = jnp.zeros((B_pad, in_pad), jnp.float32).at[:B, :D].set(x.astype(jnp.float32))

    kernel = _make_fused_encoder_kernel(params["descs"], params["hidden_dim"])

    in_specs = [pl.BlockSpec((TB, in_pad), lambda i: (i, 0))]
    for p in flat:
        # Whole-array blocks with a constant index_map -> weights stay resident
        # in VMEM across batch-grid steps (DMA'd once).
        in_specs.append(pl.BlockSpec(p.shape, lambda i, n=p.ndim: (0,) * n))
    out_spec = pl.BlockSpec((TB, head_pad), lambda i: (i, 0))

    out = pl.pallas_call(
        kernel,
        out_shape=jax.ShapeDtypeStruct((B_pad, head_pad), jnp.float32),
        grid=(B_pad // TB,),
        in_specs=in_specs,
        out_specs=out_spec,
        compiler_params=pltpu.CompilerParams(
            dimension_semantics=("parallel",),  # shard batch tiles across TCs (v7x)
        ),
    )(x_p, *flat)

    mu = out[:B, :out_dim]
    log_var = out[:B, out_dim:2 * out_dim]
    return mu, log_var


# ---------------------------------------------------------------------------
# Pure-JAX reference (unpadded params) for a correctness check
# ---------------------------------------------------------------------------
def _ref_forward(raw, x):
    hp = jax.lax.Precision.HIGHEST

    def ln_layer(h, w, b, g, bt):
        h = jnp.maximum(jnp.dot(h, w, precision=hp) + b, 0.0)
        m = jnp.mean(h, axis=-1, keepdims=True)
        v = jnp.mean((h - m) ** 2, axis=-1, keepdims=True)
        return (h - m) * jax.lax.rsqrt(v + LN_EPS) * g + bt

    for blk in raw["blocks"]:
        x_in = x
        h = x
        for (w, b, g, bt) in blk["layers"]:
            h = ln_layer(h, w, b, g, bt)
        if blk["shortcut"] is not None:
            sc = jnp.dot(x_in, blk["shortcut"][0], precision=hp) + blk["shortcut"][1]
        else:
            sc = x_in
        x = jnp.maximum(sc + h, 0.0)
    mu = jnp.dot(x, raw["fc_mu"][0], precision=hp) + raw["fc_mu"][1]
    lv = jnp.dot(x, raw["fc_logvar"][0], precision=hp) + raw["fc_logvar"][1]
    return mu, lv


# ---------------------------------------------------------------------------
if __name__ == "__main__":
    # Small, module-consistent shapes: x is (batch, input_dim) for an MLP VAE encoder.
    batch = 8
    input_dim = 16
    hidden_dim = 32
    output_dim = 2
    hidden_layers = (2, 2)

    key = jax.random.PRNGKey(0)
    k_params, k_x = jax.random.split(key)

    params = init_res_vae_encoder(
        k_params, input_dim, output_dim=output_dim,
        hidden_dim=hidden_dim, hidden_layers=hidden_layers,
    )
    x = jax.random.normal(k_x, (batch, input_dim), jnp.float32)

    fwd = jax.jit(lambda xx: res_vae_encoder_apply(params, xx))
    mu, log_var = fwd(x)
    jax.block_until_ready((mu, log_var))

    assert mu.shape == (batch, output_dim)
    assert log_var.shape == (batch, output_dim)

    mu_ref, lv_ref = _ref_forward(params["raw"], x)
    assert jnp.allclose(mu, mu_ref, atol=1e-2, rtol=1e-2), "mu mismatch vs reference"
    assert jnp.allclose(log_var, lv_ref, atol=1e-2, rtol=1e-2), "log_var mismatch vs reference"

    print("KERNEL_OK")
</pallas_src>

<mosaic_0001>
module attributes {stable_mosaic.version = 11 : i64} {
  func.func @kernel(%arg0: i32, %arg1: memref<8x128xf32, #tpu.memory_space<vmem>>, %arg2: memref<128x128xf32, #tpu.memory_space<vmem>>, %arg3: memref<3x128xf32, #tpu.memory_space<vmem>>, %arg4: memref<128x128xf32, #tpu.memory_space<vmem>>, %arg5: memref<3x128xf32, #tpu.memory_space<vmem>>, %arg6: memref<128x128xf32, #tpu.memory_space<vmem>>, %arg7: memref<3x128xf32, #tpu.memory_space<vmem>>, %arg8: memref<128x128xf32, #tpu.memory_space<vmem>>, %arg9: memref<3x128xf32, #tpu.memory_space<vmem>>, %arg10: memref<128x128xf32, #tpu.memory_space<vmem>>, %arg11: memref<1x128xf32, #tpu.memory_space<vmem>>, %arg12: memref<128x128xf32, #tpu.memory_space<vmem>>, %arg13: memref<3x128xf32, #tpu.memory_space<vmem>>, %arg14: memref<128x128xf32, #tpu.memory_space<vmem>>, %arg15: memref<3x128xf32, #tpu.memory_space<vmem>>, %arg16: memref<128x128xf32, #tpu.memory_space<vmem>>, %arg17: memref<3x128xf32, #tpu.memory_space<vmem>>, %arg18: memref<128x128xf32, #tpu.memory_space<vmem>>, %arg19: memref<3x128xf32, #tpu.memory_space<vmem>>, %arg20: memref<128x128xf32, #tpu.memory_space<vmem>>, %arg21: memref<1x128xf32, #tpu.memory_space<vmem>>, %arg22: memref<8x128xf32, #tpu.memory_space<vmem>>) attributes {dimension_semantics = [#tpu.dimension_semantics<parallel>], iteration_bounds = array<i64: 1>, scalar_prefetch = 0 : i64, scratch_operands = 0 : i64, tpu.core_type = #tpu.core_type<tc>, window_params = [{transform_indices = @transform_0, window_bounds = array<i64: 8, 128>}, {pipeline_mode = #tpu.pipeline_mode<synchronous>, transform_indices = @transform_1, window_bounds = array<i64: 128, 128>}, {pipeline_mode = #tpu.pipeline_mode<synchronous>, transform_indices = @transform_2, window_bounds = array<i64: 3, 128>}, {pipeline_mode = #tpu.pipeline_mode<synchronous>, transform_indices = @transform_3, window_bounds = array<i64: 128, 128>}, {pipeline_mode = #tpu.pipeline_mode<synchronous>, transform_indices = @transform_4, window_bounds = array<i64: 3, 128>}, {pipeline_mode = #tpu.pipeline_mode<synchronous>, transform_indices = @transform_5, window_bounds = array<i64: 128, 128>}, {pipeline_mode = #tpu.pipeline_mode<synchronous>, transform_indices = @transform_6, window_bounds = array<i64: 3, 128>}, {pipeline_mode = #tpu.pipeline_mode<synchronous>, transform_indices = @transform_7, window_bounds = array<i64: 128, 128>}, {pipeline_mode = #tpu.pipeline_mode<synchronous>, transform_indices = @transform_8, window_bounds = array<i64: 3, 128>}, {pipeline_mode = #tpu.pipeline_mode<synchronous>, transform_indices = @transform_9, window_bounds = array<i64: 128, 128>}, {pipeline_mode = #tpu.pipeline_mode<synchronous>, transform_indices = @transform_10, window_bounds = array<i64: 1, 128>}, {pipeline_mode = #tpu.pipeline_mode<synchronous>, transform_indices = @transform_11, window_bounds = array<i64: 128, 128>}, {pipeline_mode = #tpu.pipeline_mode<synchronous>, transform_indices = @transform_12, window_bounds = array<i64: 3, 128>}, {pipeline_mode = #tpu.pipeline_mode<synchronous>, transform_indices = @transform_13, window_bounds = array<i64: 128, 128>}, {pipeline_mode = #tpu.pipeline_mode<synchronous>, transform_indices = @transform_14, window_bounds = array<i64: 3, 128>}, {pipeline_mode = #tpu.pipeline_mode<synchronous>, transform_indices = @transform_15, window_bounds = array<i64: 128, 128>}, {pipeline_mode = #tpu.pipeline_mode<synchronous>, transform_indices = @transform_16, window_bounds = array<i64: 3, 128>}, {pipeline_mode = #tpu.pipeline_mode<synchronous>, transform_indices = @transform_17, window_bounds = array<i64: 128, 128>}, {pipeline_mode = #tpu.pipeline_mode<synchronous>, transform_indices = @transform_18, window_bounds = array<i64: 3, 128>}, {pipeline_mode = #tpu.pipeline_mode<synchronous>, transform_indices = @transform_19, window_bounds = array<i64: 128, 128>}, {pipeline_mode = #tpu.pipeline_mode<synchronous>, transform_indices = @transform_20, window_bounds = array<i64: 1, 128>}, {transform_indices = @transform_21, window_bounds = array<i64: 8, 128>}]} {
    %c0 = arith.constant 0 : index
    %c0_0 = arith.constant 0 : index
    %0 = vector.load %arg1[%c0, %c0_0] : memref<8x128xf32, #tpu.memory_space<vmem>>, vector<8x128xf32>
    %c0_1 = arith.constant 0 : index
    %c0_2 = arith.constant 0 : index
    %1 = vector.load %arg2[%c0_1, %c0_2] : memref<128x128xf32, #tpu.memory_space<vmem>>, vector<128x128xf32>
    %c0_3 = arith.constant 0 : index
    %c0_4 = arith.constant 0 : index
    %2 = vector.load %arg3[%c0_3, %c0_4] : memref<3x128xf32, #tpu.memory_space<vmem>>, vector<3x128xf32>
    %3 = vector.extract_strided_slice %2 {offsets = [0, 0], sizes = [1, 128], strides = [1, 1]} : vector<3x128xf32> to vector<1x128xf32>
    %4 = vector.extract_strided_slice %2 {offsets = [1, 0], sizes = [1, 128], strides = [1, 1]} : vector<3x128xf32> to vector<1x128xf32>
    %5 = vector.extract_strided_slice %2 {offsets = [2, 0], sizes = [1, 128], strides = [1, 1]} : vector<3x128xf32> to vector<1x128xf32>
    %cst = arith.constant dense<0.000000e+00> : vector<8x128xf32>
    %6 = tpu.matmul %0, %1, %cst {dimension_numbers = #tpu.dot_dimension_numbers<[1], [0], [0], [1], [0, 0, 1, 1], [], []>} : vector<8x128xf32>, vector<128x128xf32>, vector<8x128xf32> -> vector<8x128xf32>
    %7 = vector.broadcast %3 : vector<1x128xf32> to vector<8x128xf32>
    %8 = arith.addf %6, %7 : vector<8x128xf32>
    %cst_5 = arith.constant 0.000000e+00 : f32
    %9 = vector.broadcast %cst_5 : f32 to vector<8x128xf32>
    %10 = arith.maximumf %8, %9 : vector<8x128xf32>
    %cst_6 = arith.constant dense<0.000000e+00> : vector<8xf32>
    %11 = vector.multi_reduction <add>, %10, %cst_6 [1] : vector<8x128xf32> to vector<8xf32>
    %12 = vector.shape_cast %11 : vector<8xf32> to vector<8x1xf32>
    %cst_7 = arith.constant 3.125000e-02 : f32
    %13 = vector.broadcast %cst_7 : f32 to vector<8x1xf32>
    %14 = arith.mulf %12, %13 : vector<8x1xf32>
    %15 = arith.mulf %10, %10 : vector<8x128xf32>
    %cst_8 = arith.constant dense<0.000000e+00> : vector<8xf32>
    %16 = vector.multi_reduction <add>, %15, %cst_8 [1] : vector<8x128xf32> to vector<8xf32>
    %17 = vector.shape_cast %16 : vector<8xf32> to vector<8x1xf32>
    %cst_9 = arith.constant 3.125000e-02 : f32
    %18 = vector.broadcast %cst_9 : f32 to vector<8x1xf32>
    %19 = arith.mulf %17, %18 : vector<8x1xf32>
    %20 = arith.mulf %14, %14 : vector<8x1xf32>
    %21 = arith.subf %19, %20 : vector<8x1xf32>
    %cst_10 = arith.constant 9.99999974E-6 : f32
    %22 = vector.broadcast %cst_10 : f32 to vector<8x1xf32>
    %23 = arith.addf %21, %22 : vector<8x1xf32>
    %24 = math.rsqrt %23 : vector<8x1xf32>
    %25 = vector.broadcast %24 : vector<8x1xf32> to vector<8x128xf32>
    %26 = vector.broadcast %4 : vector<1x128xf32> to vector<8x128xf32>
    %27 = arith.mulf %25, %26 : vector<8x128xf32>
    %28 = arith.mulf %10, %27 : vector<8x128xf32>
    %29 = vector.broadcast %14 : vector<8x1xf32> to vector<8x128xf32>
    %30 = arith.mulf %29, %27 : vector<8x128xf32>
    %31 = vector.broadcast %5 : vector<1x128xf32> to vector<8x128xf32>
    %32 = arith.subf %31, %30 : vector<8x128xf32>
    %33 = arith.addf %28, %32 : vector<8x128xf32>
    %c0_11 = arith.constant 0 : index
    %c0_12 = arith.constant 0 : index
    %34 = vector.load %arg4[%c0_11, %c0_12] : memref<128x128xf32, #tpu.memory_space<vmem>>, vector<128x128xf32>
    %c0_13 = arith.constant 0 : index
    %c0_14 = arith.constant 0 : index
    %35 = vector.load %arg5[%c0_13, %c0_14] : memref<3x128xf32, #tpu.memory_space<vmem>>, vector<3x128xf32>
    %36 = vector.extract_strided_slice %35 {offsets = [0, 0], sizes = [1, 128], strides = [1, 1]} : vector<3x128xf32> to vector<1x128xf32>
    %37 = vector.extract_strided_slice %35 {offsets = [1, 0], sizes = [1, 128], strides = [1, 1]} : vector<3x128xf32> to vector<1x128xf32>
    %38 = vector.extract_strided_slice %35 {offsets = [2, 0], sizes = [1, 128], strides = [1, 1]} : vector<3x128xf32> to vector<1x128xf32>
    %cst_15 = arith.constant dense<0.000000e+00> : vector<8x128xf32>
    %39 = tpu.matmul %33, %34, %cst_15 {dimension_numbers = #tpu.dot_dimension_numbers<[1], [0], [0], [1], [0, 0, 1, 1], [], []>} : vector<8x128xf32>, vector<128x128xf32>, vector<8x128xf32> -> vector<8x128xf32>
    %40 = vector.broadcast %36 : vector<1x128xf32> to vector<8x128xf32>
    %41 = arith.addf %39, %40 : vector<8x128xf32>
    %cst_16 = arith.constant 0.000000e+00 : f32
    %42 = vector.broadcast %cst_16 : f32 to vector<8x128xf32>
    %43 = arith.maximumf %41, %42 : vector<8x128xf32>
    %cst_17 = arith.constant dense<0.000000e+00> : vector<8xf32>
    %44 = vector.multi_reduction <add>, %43, %cst_17 [1] : vector<8x128xf32> to vector<8xf32>
    %45 = vector.shape_cast %44 : vector<8xf32> to vector<8x1xf32>
    %cst_18 = arith.constant 3.125000e-02 : f32
    %46 = vector.broadcast %cst_18 : f32 to vector<8x1xf32>
    %47 = arith.mulf %45, %46 : vector<8x1xf32>
    %48 = arith.mulf %43, %43 : vector<8x128xf32>
    %cst_19 = arith.constant dense<0.000000e+00> : vector<8xf32>
    %49 = vector.multi_reduction <add>, %48, %cst_19 [1] : vector<8x128xf32> to vector<8xf32>
    %50 = vector.shape_cast %49 : vector<8xf32> to vector<8x1xf32>
    %cst_20 = arith.constant 3.125000e-02 : f32
    %51 = vector.broadcast %cst_20 : f32 to vector<8x1xf32>
    %52 = arith.mulf %50, %51 : vector<8x1xf32>
    %53 = arith.mulf %47, %47 : vector<8x1xf32>
    %54 = arith.subf %52, %53 : vector<8x1xf32>
    %cst_21 = arith.constant 9.99999974E-6 : f32
    %55 = vector.broadcast %cst_21 : f32 to vector<8x1xf32>
    %56 = arith.addf %54, %55 : vector<8x1xf32>
    %57 = math.rsqrt %56 : vector<8x1xf32>
    %58 = vector.broadcast %57 : vector<8x1xf32> to vector<8x128xf32>
    %59 = vector.broadcast %37 : vector<1x128xf32> to vector<8x128xf32>
    %60 = arith.mulf %58, %59 : vector<8x128xf32>
    %61 = arith.mulf %43, %60 : vector<8x128xf32>
    %62 = vector.broadcast %47 : vector<8x1xf32> to vector<8x128xf32>
    %63 = arith.mulf %62, %60 : vector<8x128xf32>
    %64 = vector.broadcast %38 : vector<1x128xf32> to vector<8x128xf32>
    %65 = arith.subf %64, %63 : vector<8x128xf32>
    %66 = arith.addf %61, %65 : vector<8x128xf32>
    %c0_22 = arith.constant 0 : index
    %c0_23 = arith.constant 0 : index
    %67 = vector.load %arg6[%c0_22, %c0_23] : memref<128x128xf32, #tpu.memory_space<vmem>>, vector<128x128xf32>
    %c0_24 = arith.constant 0 : index
    %c0_25 = arith.constant 0 : index
    %68 = vector.load %arg7[%c0_24, %c0_25] : memref<3x128xf32, #tpu.memory_space<vmem>>, vector<3x128xf32>
    %69 = vector.extract_strided_slice %68 {offsets = [0, 0], sizes = [1, 128], strides = [1, 1]} : vector<3x128xf32> to vector<1x128xf32>
    %70 = vector.extract_strided_slice %68 {offsets = [1, 0], sizes = [1, 128], strides = [1, 1]} : vector<3x128xf32> to vector<1x128xf32>
    %71 = vector.extract_strided_slice %68 {offsets = [2, 0], sizes = [1, 128], strides = [1, 1]} : vector<3x128xf32> to vector<1x128xf32>
    %cst_26 = arith.constant dense<0.000000e+00> : vector<8x128xf32>
    %72 = tpu.matmul %66, %67, %cst_26 {dimension_numbers = #tpu.dot_dimension_numbers<[1], [0], [0], [1], [0, 0, 1, 1], [], []>} : vector<8x128xf32>, vector<128x128xf32>, vector<8x128xf32> -> vector<8x128xf32>
    %73 = vector.broadcast %69 : vector<1x128xf32> to vector<8x128xf32>
    %74 = arith.addf %72, %73 : vector<8x128xf32>
    %cst_27 = arith.constant 0.000000e+00 : f32
    %75 = vector.broadcast %cst_27 : f32 to vector<8x128xf32>
    %76 = arith.maximumf %74, %75 : vector<8x128xf32>
    %cst_28 = arith.constant dense<0.000000e+00> : vector<8xf32>
    %77 = vector.multi_reduction <add>, %76, %cst_28 [1] : vector<8x128xf32> to vector<8xf32>
    %78 = vector.shape_cast %77 : vector<8xf32> to vector<8x1xf32>
    %cst_29 = arith.constant 3.125000e-02 : f32
    %79 = vector.broadcast %cst_29 : f32 to vector<8x1xf32>
    %80 = arith.mulf %78, %79 : vector<8x1xf32>
    %81 = arith.mulf %76, %76 : vector<8x128xf32>
    %cst_30 = arith.constant dense<0.000000e+00> : vector<8xf32>
    %82 = vector.multi_reduction <add>, %81, %cst_30 [1] : vector<8x128xf32> to vector<8xf32>
    %83 = vector.shape_cast %82 : vector<8xf32> to vector<8x1xf32>
    %cst_31 = arith.constant 3.125000e-02 : f32
    %84 = vector.broadcast %cst_31 : f32 to vector<8x1xf32>
    %85 = arith.mulf %83, %84 : vector<8x1xf32>
    %86 = arith.mulf %80, %80 : vector<8x1xf32>
    %87 = arith.subf %85, %86 : vector<8x1xf32>
    %cst_32 = arith.constant 9.99999974E-6 : f32
    %88 = vector.broadcast %cst_32 : f32 to vector<8x1xf32>
    %89 = arith.addf %87, %88 : vector<8x1xf32>
    %90 = math.rsqrt %89 : vector<8x1xf32>
    %91 = vector.broadcast %90 : vector<8x1xf32> to vector<8x128xf32>
    %92 = vector.broadcast %70 : vector<1x128xf32> to vector<8x128xf32>
    %93 = arith.mulf %91, %92 : vector<8x128xf32>
    %94 = arith.mulf %76, %93 : vector<8x128xf32>
    %95 = vector.broadcast %80 : vector<8x1xf32> to vector<8x128xf32>
    %96 = arith.mulf %95, %93 : vector<8x128xf32>
    %97 = vector.broadcast %71 : vector<1x128xf32> to vector<8x128xf32>
    %98 = arith.subf %97, %96 : vector<8x128xf32>
    %99 = arith.addf %94, %98 : vector<8x128xf32>
    %c0_33 = arith.constant 0 : index
    %c0_34 = arith.constant 0 : index
    %100 = vector.load %arg8[%c0_33, %c0_34] : memref<128x128xf32, #tpu.memory_space<vmem>>, vector<128x128xf32>
    %c0_35 = arith.constant 0 : index
    %c0_36 = arith.constant 0 : index
    %101 = vector.load %arg9[%c0_35, %c0_36] : memref<3x128xf32, #tpu.memory_space<vmem>>, vector<3x128xf32>
    %102 = vector.extract_strided_slice %101 {offsets = [0, 0], sizes = [1, 128], strides = [1, 1]} : vector<3x128xf32> to vector<1x128xf32>
    %103 = vector.extract_strided_slice %101 {offsets = [1, 0], sizes = [1, 128], strides = [1, 1]} : vector<3x128xf32> to vector<1x128xf32>
    %104 = vector.extract_strided_slice %101 {offsets = [2, 0], sizes = [1, 128], strides = [1, 1]} : vector<3x128xf32> to vector<1x128xf32>
    %cst_37 = arith.constant dense<0.000000e+00> : vector<8x128xf32>
    %105 = tpu.matmul %99, %100, %cst_37 {dimension_numbers = #tpu.dot_dimension_numbers<[1], [0], [0], [1], [0, 0, 1, 1], [], []>} : vector<8x128xf32>, vector<128x128xf32>, vector<8x128xf32> -> vector<8x128xf32>
    %106 = vector.broadcast %102 : vector<1x128xf32> to vector<8x128xf32>
    %107 = arith.addf %105, %106 : vector<8x128xf32>
    %cst_38 = arith.constant 0.000000e+00 : f32
    %108 = vector.broadcast %cst_38 : f32 to vector<8x128xf32>
    %109 = arith.maximumf %107, %108 : vector<8x128xf32>
    %cst_39 = arith.constant dense<0.000000e+00> : vector<8xf32>
    %110 = vector.multi_reduction <add>, %109, %cst_39 [1] : vector<8x128xf32> to vector<8xf32>
    %111 = vector.shape_cast %110 : vector<8xf32> to vector<8x1xf32>
    %cst_40 = arith.constant 3.125000e-02 : f32
    %112 = vector.broadcast %cst_40 : f32 to vector<8x1xf32>
    %113 = arith.mulf %111, %112 : vector<8x1xf32>
    %114 = arith.mulf %109, %109 : vector<8x128xf32>
    %cst_41 = arith.constant dense<0.000000e+00> : vector<8xf32>
    %115 = vector.multi_reduction <add>, %114, %cst_41 [1] : vector<8x128xf32> to vector<8xf32>
    %116 = vector.shape_cast %115 : vector<8xf32> to vector<8x1xf32>
    %cst_42 = arith.constant 3.125000e-02 : f32
    %117 = vector.broadcast %cst_42 : f32 to vector<8x1xf32>
    %118 = arith.mulf %116, %117 : vector<8x1xf32>
    %119 = arith.mulf %113, %113 : vector<8x1xf32>
    %120 = arith.subf %118, %119 : vector<8x1xf32>
    %cst_43 = arith.constant 9.99999974E-6 : f32
    %121 = vector.broadcast %cst_43 : f32 to vector<8x1xf32>
    %122 = arith.addf %120, %121 : vector<8x1xf32>
    %123 = math.rsqrt %122 : vector<8x1xf32>
    %124 = vector.broadcast %123 : vector<8x1xf32> to vector<8x128xf32>
    %125 = vector.broadcast %103 : vector<1x128xf32> to vector<8x128xf32>
    %126 = arith.mulf %124, %125 : vector<8x128xf32>
    %127 = arith.mulf %109, %126 : vector<8x128xf32>
    %128 = vector.broadcast %113 : vector<8x1xf32> to vector<8x128xf32>
    %129 = arith.mulf %128, %126 : vector<8x128xf32>
    %130 = vector.broadcast %104 : vector<1x128xf32> to vector<8x128xf32>
    %131 = arith.subf %130, %129 : vector<8x128xf32>
    %132 = arith.addf %127, %131 : vector<8x128xf32>
    %c0_44 = arith.constant 0 : index
    %c0_45 = arith.constant 0 : index
    %133 = vector.load %arg10[%c0_44, %c0_45] : memref<128x128xf32, #tpu.memory_space<vmem>>, vector<128x128xf32>
    %c0_46 = arith.constant 0 : index
    %c0_47 = arith.constant 0 : index
    %134 = vector.load %arg11[%c0_46, %c0_47] : memref<1x128xf32, #tpu.memory_space<vmem>>, vector<1x128xf32>
    %cst_48 = arith.constant dense<0.000000e+00> : vector<8x128xf32>
    %135 = tpu.matmul %0, %133, %cst_48 {dimension_numbers = #tpu.dot_dimension_numbers<[1], [0], [0], [1], [0, 0, 1, 1], [], []>} : vector<8x128xf32>, vector<128x128xf32>, vector<8x128xf32> -> vector<8x128xf32>
    %136 = vector.broadcast %134 : vector<1x128xf32> to vector<8x128xf32>
    %137 = arith.addf %135, %136 : vector<8x128xf32>
    %138 = arith.addf %137, %132 : vector<8x128xf32>
    %cst_49 = arith.constant 0.000000e+00 : f32
    %139 = vector.broadcast %cst_49 : f32 to vector<8x128xf32>
    %140 = arith.maximumf %138, %139 : vector<8x128xf32>
    %c0_50 = arith.constant 0 : index
    %c0_51 = arith.constant 0 : index
    %141 = vector.load %arg12[%c0_50, %c0_51] : memref<128x128xf32, #tpu.memory_space<vmem>>, vector<128x128xf32>
    %c0_52 = arith.constant 0 : index
    %c0_53 = arith.constant 0 : index
    %142 = vector.load %arg13[%c0_52, %c0_53] : memref<3x128xf32, #tpu.memory_space<vmem>>, vector<3x128xf32>
    %143 = vector.extract_strided_slice %142 {offsets = [0, 0], sizes = [1, 128], strides = [1, 1]} : vector<3x128xf32> to vector<1x128xf32>
    %144 = vector.extract_strided_slice %142 {offsets = [1, 0], sizes = [1, 128], strides = [1, 1]} : vector<3x128xf32> to vector<1x128xf32>
    %145 = vector.extract_strided_slice %142 {offsets = [2, 0], sizes = [1, 128], strides = [1, 1]} : vector<3x128xf32> to vector<1x128xf32>
    %cst_54 = arith.constant dense<0.000000e+00> : vector<8x128xf32>
    %146 = tpu.matmul %140, %141, %cst_54 {dimension_numbers = #tpu.dot_dimension_numbers<[1], [0], [0], [1], [0, 0, 1, 1], [], []>} : vector<8x128xf32>, vector<128x128xf32>, vector<8x128xf32> -> vector<8x128xf32>
    %147 = vector.broadcast %143 : vector<1x128xf32> to vector<8x128xf32>
    %148 = arith.addf %146, %147 : vector<8x128xf32>
    %cst_55 = arith.constant 0.000000e+00 : f32
    %149 = vector.broadcast %cst_55 : f32 to vector<8x128xf32>
    %150 = arith.maximumf %148, %149 : vector<8x128xf32>
    %cst_56 = arith.constant dense<0.000000e+00> : vector<8xf32>
    %151 = vector.multi_reduction <add>, %150, %cst_56 [1] : vector<8x128xf32> to vector<8xf32>
    %152 = vector.shape_cast %151 : vector<8xf32> to vector<8x1xf32>
    %cst_57 = arith.constant 3.125000e-02 : f32
    %153 = vector.broadcast %cst_57 : f32 to vector<8x1xf32>
    %154 = arith.mulf %152, %153 : vector<8x1xf32>
    %155 = arith.mulf %150, %150 : vector<8x128xf32>
    %cst_58 = arith.constant dense<0.000000e+00> : vector<8xf32>
    %156 = vector.multi_reduction <add>, %155, %cst_58 [1] : vector<8x128xf32> to vector<8xf32>
    %157 = vector.shape_cast %156 : vector<8xf32> to vector<8x1xf32>
    %cst_59 = arith.constant 3.125000e-02 : f32
    %158 = vector.broadcast %cst_59 : f32 to vector<8x1xf32>
    %159 = arith.mulf %157, %158 : vector<8x1xf32>
    %160 = arith.mulf %154, %154 : vector<8x1xf32>
    %161 = arith.subf %159, %160 : vector<8x1xf32>
    %cst_60 = arith.constant 9.99999974E-6 : f32
    %162 = vector.broadcast %cst_60 : f32 to vector<8x1xf32>
    %163 = arith.addf %161, %162 : vector<8x1xf32>
    %164 = math.rsqrt %163 : vector<8x1xf32>
    %165 = vector.broadcast %164 : vector<8x1xf32> to vector<8x128xf32>
    %166 = vector.broadcast %144 : vector<1x128xf32> to vector<8x128xf32>
    %167 = arith.mulf %165, %166 : vector<8x128xf32>
    %168 = arith.mulf %150, %167 : vector<8x128xf32>
    %169 = vector.broadcast %154 : vector<8x1xf32> to vector<8x128xf32>
    %170 = arith.mulf %169, %167 : vector<8x128xf32>
    %171 = vector.broadcast %145 : vector<1x128xf32> to vector<8x128xf32>
    %172 = arith.subf %171, %170 : vector<8x128xf32>
    %173 = arith.addf %168, %172 : vector<8x128xf32>
    %c0_61 = arith.constant 0 : index
    %c0_62 = arith.constant 0 : index
    %174 = vector.load %arg14[%c0_61, %c0_62] : memref<128x128xf32, #tpu.memory_space<vmem>>, vector<128x128xf32>
    %c0_63 = arith.constant 0 : index
    %c0_64 = arith.constant 0 : index
    %175 = vector.load %arg15[%c0_63, %c0_64] : memref<3x128xf32, #tpu.memory_space<vmem>>, vector<3x128xf32>
    %176 = vector.extract_strided_slice %175 {offsets = [0, 0], sizes = [1, 128], strides = [1, 1]} : vector<3x128xf32> to vector<1x128xf32>
    %177 = vector.extract_strided_slice %175 {offsets = [1, 0], sizes = [1, 128], strides = [1, 1]} : vector<3x128xf32> to vector<1x128xf32>
    %178 = vector.extract_strided_slice %175 {offsets = [2, 0], sizes = [1, 128], strides = [1, 1]} : vector<3x128xf32> to vector<1x128xf32>
    %cst_65 = arith.constant dense<0.000000e+00> : vector<8x128xf32>
    %179 = tpu.matmul %173, %174, %cst_65 {dimension_numbers = #tpu.dot_dimension_numbers<[1], [0], [0], [1], [0, 0, 1, 1], [], []>} : vector<8x128xf32>, vector<128x128xf32>, vector<8x128xf32> -> vector<8x128xf32>
    %180 = vector.broadcast %176 : vector<1x128xf32> to vector<8x128xf32>
    %181 = arith.addf %179, %180 : vector<8x128xf32>
    %cst_66 = arith.constant 0.000000e+00 : f32
    %182 = vector.broadcast %cst_66 : f32 to vector<8x128xf32>
    %183 = arith.maximumf %181, %182 : vector<8x128xf32>
    %cst_67 = arith.constant dense<0.000000e+00> : vector<8xf32>
    %184 = vector.multi_reduction <add>, %183, %cst_67 [1] : vector<8x128xf32> to vector<8xf32>
    %185 = vector.shape_cast %184 : vector<8xf32> to vector<8x1xf32>
    %cst_68 = arith.constant 3.125000e-02 : f32
    %186 = vector.broadcast %cst_68 : f32 to vector<8x1xf32>
    %187 = arith.mulf %185, %186 : vector<8x1xf32>
    %188 = arith.mulf %183, %183 : vector<8x128xf32>
    %cst_69 = arith.constant dense<0.000000e+00> : vector<8xf32>
    %189 = vector.multi_reduction <add>, %188, %cst_69 [1] : vector<8x128xf32> to vector<8xf32>
    %190 = vector.shape_cast %189 : vector<8xf32> to vector<8x1xf32>
    %cst_70 = arith.constant 3.125000e-02 : f32
    %191 = vector.broadcast %cst_70 : f32 to vector<8x1xf32>
    %192 = arith.mulf %190, %191 : vector<8x1xf32>
    %193 = arith.mulf %187, %187 : vector<8x1xf32>
    %194 = arith.subf %192, %193 : vector<8x1xf32>
    %cst_71 = arith.constant 9.99999974E-6 : f32
    %195 = vector.broadcast %cst_71 : f32 to vector<8x1xf32>
    %196 = arith.addf %194, %195 : vector<8x1xf32>
    %197 = math.rsqrt %196 : vector<8x1xf32>
    %198 = vector.broadcast %197 : vector<8x1xf32> to vector<8x128xf32>
    %199 = vector.broadcast %177 : vector<1x128xf32> to vector<8x128xf32>
    %200 = arith.mulf %198, %199 : vector<8x128xf32>
    %201 = arith.mulf %183, %200 : vector<8x128xf32>
    %202 = vector.broadcast %187 : vector<8x1xf32> to vector<8x128xf32>
    %203 = arith.mulf %202, %200 : vector<8x128xf32>
    %204 = vector.broadcast %178 : vector<1x128xf32> to vector<8x128xf32>
    %205 = arith.subf %204, %203 : vector<8x128xf32>
    %206 = arith.addf %201, %205 : vector<8x128xf32>
    %c0_72 = arith.constant 0 : index
    %c0_73 = arith.constant 0 : index
    %207 = vector.load %arg16[%c0_72, %c0_73] : memref<128x128xf32, #tpu.memory_space<vmem>>, vector<128x128xf32>
    %c0_74 = arith.constant 0 : index
    %c0_75 = arith.constant 0 : index
    %208 = vector.load %arg17[%c0_74, %c0_75] : memref<3x128xf32, #tpu.memory_space<vmem>>, vector<3x128xf32>
    %209 = vector.extract_strided_slice %208 {offsets = [0, 0], sizes = [1, 128], strides = [1, 1]} : vector<3x128xf32> to vector<1x128xf32>
    %210 = vector.extract_strided_slice %208 {offsets = [1, 0], sizes = [1, 128], strides = [1, 1]} : vector<3x128xf32> to vector<1x128xf32>
    %211 = vector.extract_strided_slice %208 {offsets = [2, 0], sizes = [1, 128], strides = [1, 1]} : vector<3x128xf32> to vector<1x128xf32>
    %cst_76 = arith.constant dense<0.000000e+00> : vector<8x128xf32>
    %212 = tpu.matmul %206, %207, %cst_76 {dimension_numbers = #tpu.dot_dimension_numbers<[1], [0], [0], [1], [0, 0, 1, 1], [], []>} : vector<8x128xf32>, vector<128x128xf32>, vector<8x128xf32> -> vector<8x128xf32>
    %213 = vector.broadcast %209 : vector<1x128xf32> to vector<8x128xf32>
    %214 = arith.addf %212, %213 : vector<8x128xf32>
    %cst_77 = arith.constant 0.000000e+00 : f32
    %215 = vector.broadcast %cst_77 : f32 to vector<8x128xf32>
    %216 = arith.maximumf %214, %215 : vector<8x128xf32>
    %cst_78 = arith.constant dense<0.000000e+00> : vector<8xf32>
    %217 = vector.multi_reduction <add>, %216, %cst_78 [1] : vector<8x128xf32> to vector<8xf32>
    %218 = vector.shape_cast %217 : vector<8xf32> to vector<8x1xf32>
    %cst_79 = arith.constant 3.125000e-02 : f32
    %219 = vector.broadcast %cst_79 : f32 to vector<8x1xf32>
    %220 = arith.mulf %218, %219 : vector<8x1xf32>
    %221 = arith.mulf %216, %216 : vector<8x128xf32>
    %cst_80 = arith.constant dense<0.000000e+00> : vector<8xf32>
    %222 = vector.multi_reduction <add>, %221, %cst_80 [1] : vector<8x128xf32> to vector<8xf32>
    %223 = vector.shape_cast %222 : vector<8xf32> to vector<8x1xf32>
    %cst_81 = arith.constant 3.125000e-02 : f32
    %224 = vector.broadcast %cst_81 : f32 to vector<8x1xf32>
    %225 = arith.mulf %223, %224 : vector<8x1xf32>
    %226 = arith.mulf %220, %220 : vector<8x1xf32>
    %227 = arith.subf %225, %226 : vector<8x1xf32>
    %cst_82 = arith.constant 9.99999974E-6 : f32
    %228 = vector.broadcast %cst_82 : f32 to vector<8x1xf32>
    %229 = arith.addf %227, %228 : vector<8x1xf32>
    %230 = math.rsqrt %229 : vector<8x1xf32>
    %231 = vector.broadcast %230 : vector<8x1xf32> to vector<8x128xf32>
    %232 = vector.broadcast %210 : vector<1x128xf32> to vector<8x128xf32>
    %233 = arith.mulf %231, %232 : vector<8x128xf32>
    %234 = arith.mulf %216, %233 : vector<8x128xf32>
    %235 = vector.broadcast %220 : vector<8x1xf32> to vector<8x128xf32>
    %236 = arith.mulf %235, %233 : vector<8x128xf32>
    %237 = vector.broadcast %211 : vector<1x128xf32> to vector<8x128xf32>
    %238 = arith.subf %237, %236 : vector<8x128xf32>
    %239 = arith.addf %234, %238 : vector<8x128xf32>
    %c0_83 = arith.constant 0 : index
    %c0_84 = arith.constant 0 : index
    %240 = vector.load %arg18[%c0_83, %c0_84] : memref<128x128xf32, #tpu.memory_space<vmem>>, vector<128x128xf32>
    %c0_85 = arith.constant 0 : index
    %c0_86 = arith.constant 0 : index
    %241 = vector.load %arg19[%c0_85, %c0_86] : memref<3x128xf32, #tpu.memory_space<vmem>>, vector<3x128xf32>
    %242 = vector.extract_strided_slice %241 {offsets = [0, 0], sizes = [1, 128], strides = [1, 1]} : vector<3x128xf32> to vector<1x128xf32>
    %243 = vector.extract_strided_slice %241 {offsets = [1, 0], sizes = [1, 128], strides = [1, 1]} : vector<3x128xf32> to vector<1x128xf32>
    %244 = vector.extract_strided_slice %241 {offsets = [2, 0], sizes = [1, 128], strides = [1, 1]} : vector<3x128xf32> to vector<1x128xf32>
    %cst_87 = arith.constant dense<0.000000e+00> : vector<8x128xf32>
    %245 = tpu.matmul %239, %240, %cst_87 {dimension_numbers = #tpu.dot_dimension_numbers<[1], [0], [0], [1], [0, 0, 1, 1], [], []>} : vector<8x128xf32>, vector<128x128xf32>, vector<8x128xf32> -> vector<8x128xf32>
    %246 = vector.broadcast %242 : vector<1x128xf32> to vector<8x128xf32>
    %247 = arith.addf %245, %246 : vector<8x128xf32>
    %cst_88 = arith.constant 0.000000e+00 : f32
    %248 = vector.broadcast %cst_88 : f32 to vector<8x128xf32>
    %249 = arith.maximumf %247, %248 : vector<8x128xf32>
    %cst_89 = arith.constant dense<0.000000e+00> : vector<8xf32>
    %250 = vector.multi_reduction <add>, %249, %cst_89 [1] : vector<8x128xf32> to vector<8xf32>
    %251 = vector.shape_cast %250 : vector<8xf32> to vector<8x1xf32>
    %cst_90 = arith.constant 3.125000e-02 : f32
    %252 = vector.broadcast %cst_90 : f32 to vector<8x1xf32>
    %253 = arith.mulf %251, %252 : vector<8x1xf32>
    %254 = arith.mulf %249, %249 : vector<8x128xf32>
    %cst_91 = arith.constant dense<0.000000e+00> : vector<8xf32>
    %255 = vector.multi_reduction <add>, %254, %cst_91 [1] : vector<8x128xf32> to vector<8xf32>
    %256 = vector.shape_cast %255 : vector<8xf32> to vector<8x1xf32>
    %cst_92 = arith.constant 3.125000e-02 : f32
    %257 = vector.broadcast %cst_92 : f32 to vector<8x1xf32>
    %258 = arith.mulf %256, %257 : vector<8x1xf32>
    %259 = arith.mulf %253, %253 : vector<8x1xf32>
    %260 = arith.subf %258, %259 : vector<8x1xf32>
    %cst_93 = arith.constant 9.99999974E-6 : f32
    %261 = vector.broadcast %cst_93 : f32 to vector<8x1xf32>
    %262 = arith.addf %260, %261 : vector<8x1xf32>
    %263 = math.rsqrt %262 : vector<8x1xf32>
    %264 = vector.broadcast %263 : vector<8x1xf32> to vector<8x128xf32>
    %265 = vector.broadcast %243 : vector<1x128xf32> to vector<8x128xf32>
    %266 = arith.mulf %264, %265 : vector<8x128xf32>
    %267 = arith.mulf %249, %266 : vector<8x128xf32>
    %268 = vector.broadcast %253 : vector<8x1xf32> to vector<8x128xf32>
    %269 = arith.mulf %268, %266 : vector<8x128xf32>
    %270 = vector.broadcast %244 : vector<1x128xf32> to vector<8x128xf32>
    %271 = arith.subf %270, %269 : vector<8x128xf32>
    %272 = arith.addf %267, %271 : vector<8x128xf32>
    %273 = arith.addf %140, %272 : vector<8x128xf32>
    %cst_94 = arith.constant 0.000000e+00 : f32
    %274 = vector.broadcast %cst_94 : f32 to vector<8x128xf32>
    %275 = arith.maximumf %273, %274 : vector<8x128xf32>
    %c0_95 = arith.constant 0 : index
    %c0_96 = arith.constant 0 : index
    %276 = vector.load %arg20[%c0_95, %c0_96] : memref<128x128xf32, #tpu.memory_space<vmem>>, vector<128x128xf32>
    %c0_97 = arith.constant 0 : index
    %c0_98 = arith.constant 0 : index
    %277 = vector.load %arg21[%c0_97, %c0_98] : memref<1x128xf32, #tpu.memory_space<vmem>>, vector<1x128xf32>
    %cst_99 = arith.constant dense<0.000000e+00> : vector<8x128xf32>
    %278 = tpu.matmul %275, %276, %cst_99 {dimension_numbers = #tpu.dot_dimension_numbers<[1], [0], [0], [1], [0, 0, 1, 1], [], []>} : vector<8x128xf32>, vector<128x128xf32>, vector<8x128xf32> -> vector<8x128xf32>
    %279 = vector.broadcast %277 : vector<1x128xf32> to vector<8x128xf32>
    %280 = arith.addf %278, %279 : vector<8x128xf32>
    %c0_100 = arith.constant 0 : index
    %c0_101 = arith.constant 0 : index
    %281 = vector.load %arg22[%c0_100, %c0_101] : memref<8x128xf32, #tpu.memory_space<vmem>>, vector<8x128xf32>
    tpu.vector_store %arg22[%c0_100, %c0_101], %280 {strides = array<i32>} : memref<8x128xf32, #tpu.memory_space<vmem>>, vector<8x128xf32>,
    return
  }
  func.func @transform_0(%arg0: i32) -> (i32, i32) {
    %c0_i32 = arith.constant 0 : i32
    %c0_i32_0 = arith.constant 0 : i32
    return %arg0, %c0_i32 : i32, i32
  }
  func.func @transform_1(%arg0: i32) -> (i32, i32) {
    %c0_i32 = arith.constant 0 : i32
    %c0_i32_0 = arith.constant 0 : i32
    %c0_i32_1 = arith.constant 0 : i32
    return %c0_i32, %c0_i32_0 : i32, i32
  }
  func.func @transform_2(%arg0: i32) -> (i32, i32) {
    %c0_i32 = arith.constant 0 : i32
    %c0_i32_0 = arith.constant 0 : i32
    %c0_i32_1 = arith.constant 0 : i32
    return %c0_i32, %c0_i32_0 : i32, i32
  }
  func.func @transform_3(%arg0: i32) -> (i32, i32) {
    %c0_i32 = arith.constant 0 : i32
    %c0_i32_0 = arith.constant 0 : i32
    %c0_i32_1 = arith.constant 0 : i32
    return %c0_i32, %c0_i32_0 : i32, i32
  }
  func.func @transform_4(%arg0: i32) -> (i32, i32) {
    %c0_i32 = arith.constant 0 : i32
    %c0_i32_0 = arith.constant 0 : i32
    %c0_i32_1 = arith.constant 0 : i32
    return %c0_i32, %c0_i32_0 : i32, i32
  }
  func.func @transform_5(%arg0: i32) -> (i32, i32) {
    %c0_i32 = arith.constant 0 : i32
    %c0_i32_0 = arith.constant 0 : i32
    %c0_i32_1 = arith.constant 0 : i32
    return %c0_i32, %c0_i32_0 : i32, i32
  }
  func.func @transform_6(%arg0: i32) -> (i32, i32) {
    %c0_i32 = arith.constant 0 : i32
    %c0_i32_0 = arith.constant 0 : i32
    %c0_i32_1 = arith.constant 0 : i32
    return %c0_i32, %c0_i32_0 : i32, i32
  }
  func.func @transform_7(%arg0: i32) -> (i32, i32) {
    %c0_i32 = arith.constant 0 : i32
    %c0_i32_0 = arith.constant 0 : i32
    %c0_i32_1 = arith.constant 0 : i32
    return %c0_i32, %c0_i32_0 : i32, i32
  }
  func.func @transform_8(%arg0: i32) -> (i32, i32) {
    %c0_i32 = arith.constant 0 : i32
    %c0_i32_0 = arith.constant 0 : i32
    %c0_i32_1 = arith.constant 0 : i32
    return %c0_i32, %c0_i32_0 : i32, i32
  }
  func.func @transform_9(%arg0: i32) -> (i32, i32) {
    %c0_i32 = arith.constant 0 : i32
    %c0_i32_0 = arith.constant 0 : i32
    %c0_i32_1 = arith.constant 0 : i32
    return %c0_i32, %c0_i32_0 : i32, i32
  }
  func.func @transform_10(%arg0: i32) -> (i32, i32) {
    %c0_i32 = arith.constant 0 : i32
    %c0_i32_0 = arith.constant 0 : i32
    %c0_i32_1 = arith.constant 0 : i32
    return %c0_i32, %c0_i32_0 : i32, i32
  }
  func.func @transform_11(%arg0: i32) -> (i32, i32) {
    %c0_i32 = arith.constant 0 : i32
    %c0_i32_0 = arith.constant 0 : i32
    %c0_i32_1 = arith.constant 0 : i32
    return %c0_i32, %c0_i32_0 : i32, i32
  }
  func.func @transform_12(%arg0: i32) -> (i32, i32) {
    %c0_i32 = arith.constant 0 : i32
    %c0_i32_0 = arith.constant 0 : i32
    %c0_i32_1 = arith.constant 0 : i32
    return %c0_i32, %c0_i32_0 : i32, i32
  }
  func.func @transform_13(%arg0: i32) -> (i32, i32) {
    %c0_i32 = arith.constant 0 : i32
    %c0_i32_0 = arith.constant 0 : i32
    %c0_i32_1 = arith.constant 0 : i32
    return %c0_i32, %c0_i32_0 : i32, i32
  }
  func.func @transform_14(%arg0: i32) -> (i32, i32) {
    %c0_i32 = arith.constant 0 : i32
    %c0_i32_0 = arith.constant 0 : i32
    %c0_i32_1 = arith.constant 0 : i32
    return %c0_i32, %c0_i32_0 : i32, i32
  }
  func.func @transform_15(%arg0: i32) -> (i32, i32) {
    %c0_i32 = arith.constant 0 : i32
    %c0_i32_0 = arith.constant 0 : i32
    %c0_i32_1 = arith.constant 0 : i32
    return %c0_i32, %c0_i32_0 : i32, i32
  }
  func.func @transform_16(%arg0: i32) -> (i32, i32) {
    %c0_i32 = arith.constant 0 : i32
    %c0_i32_0 = arith.constant 0 : i32
    %c0_i32_1 = arith.constant 0 : i32
    return %c0_i32, %c0_i32_0 : i32, i32
  }
  func.func @transform_17(%arg0: i32) -> (i32, i32) {
    %c0_i32 = arith.constant 0 : i32
    %c0_i32_0 = arith.constant 0 : i32
    %c0_i32_1 = arith.constant 0 : i32
    return %c0_i32, %c0_i32_0 : i32, i32
  }
  func.func @transform_18(%arg0: i32) -> (i32, i32) {
    %c0_i32 = arith.constant 0 : i32
    %c0_i32_0 = arith.constant 0 : i32
    %c0_i32_1 = arith.constant 0 : i32
    return %c0_i32, %c0_i32_0 : i32, i32
  }
  func.func @transform_19(%arg0: i32) -> (i32, i32) {
    %c0_i32 = arith.constant 0 : i32
    %c0_i32_0 = arith.constant 0 : i32
    %c0_i32_1 = arith.constant 0 : i32
    return %c0_i32, %c0_i32_0 : i32, i32
  }
  func.func @transform_20(%arg0: i32) -> (i32, i32) {
    %c0_i32 = arith.constant 0 : i32
    %c0_i32_0 = arith.constant 0 : i32
    %c0_i32_1 = arith.constant 0 : i32
    return %c0_i32, %c0_i32_0 : i32, i32
  }
  func.func @transform_21(%arg0: i32) -> (i32, i32) {
    %c0_i32 = arith.constant 0 : i32
    %c0_i32_0 = arith.constant 0 : i32
    return %arg0, %c0_i32 : i32, i32
  }
}

</mosaic_0001>

<llo_original>
// kernel: _lambda_.1
$region0: #{_lambda_.1}
  #allocation0 [shape = 'u32[]', space=smem, size = 0x4, offset = 0x4, fixed_abs, tag = 'smem constant byte address 0x4 - core index']
  #allocation1 [shape = 'u32[144,128]{1,0:T(1,128)}', space=vmem, size = 0x12000, scoped, tag = 'internal scratch']
  %s0 = inlined_call_operand.vmem [shape: f32[8,128], index: 0, kind: input, shape index: {}]
  %s1 = inlined_call_operand.hbm [shape: f32[128,128], index: 1, kind: input, shape index: {}]
  %s2 = inlined_call_operand.vmem [shape: f32[3,128], index: 2, kind: input, shape index: {}]
  %s3 = inlined_call_operand.hbm [shape: f32[128,128], index: 3, kind: input, shape index: {}]
  %s4 = inlined_call_operand.vmem [shape: f32[3,128], index: 4, kind: input, shape index: {}]
  %s5 = inlined_call_operand.hbm [shape: f32[128,128], index: 5, kind: input, shape index: {}]
  %s6 = inlined_call_operand.vmem [shape: f32[3,128], index: 6, kind: input, shape index: {}]
  %s7 = inlined_call_operand.hbm [shape: f32[128,128], index: 7, kind: input, shape index: {}]
  %s8 = inlined_call_operand.vmem [shape: f32[3,128], index: 8, kind: input, shape index: {}]
  %s9 = inlined_call_operand.hbm [shape: f32[128,128], index: 9, kind: input, shape index: {}]
  %s10 = inlined_call_operand.vmem [shape: f32[1,128], index: 10, kind: input, shape index: {}]
  %s11 = inlined_call_operand.hbm [shape: f32[128,128], index: 11, kind: input, shape index: {}]
  %s12 = inlined_call_operand.vmem [shape: f32[3,128], index: 12, kind: input, shape index: {}]
  %s13 = inlined_call_operand.hbm [shape: f32[128,128], index: 13, kind: input, shape index: {}]
  %s14 = inlined_call_operand.vmem [shape: f32[3,128], index: 14, kind: input, shape index: {}]
  %s15 = inlined_call_operand.hbm [shape: f32[128,128], index: 15, kind: input, shape index: {}]
  %s16 = inlined_call_operand.vmem [shape: f32[3,128], index: 16, kind: input, shape index: {}]
  %s17 = inlined_call_operand.hbm [shape: f32[128,128], index: 17, kind: input, shape index: {}]
  %s18 = inlined_call_operand.vmem [shape: f32[3,128], index: 18, kind: input, shape index: {}]
  %s19 = inlined_call_operand.hbm [shape: f32[128,128], index: 19, kind: input, shape index: {}]
  %s20 = inlined_call_operand.vmem [shape: f32[1,128], index: 20, kind: input, shape index: {}]
  %s21 = inlined_call_operand.vmem [shape: f32[8,128], index: 21, kind: output, shape index: {}]
  %s22 = sld [smem:[#allocation0]]
  $region134: #{_lambda_.1} parent=0
    _
  %s24 = ssub.s32 1, %s22
  %s25 = scalar_select 0, %s24, %s22
  $region1: #{_lambda_.1} parent=0
    #allocation2 [shape = 'u8[65536]{0}', space=vmem, size = 0x10000, scoped, tag = 'input window, operand 1, single buffered']
    #allocation3 [shape = 's32[1]{0}', space=sflag, size = 0x4, scoped, tag = 'scoped memory for _lambda_.1']
    #allocation4 [shape = 'u8[65536]{0}', space=vmem, size = 0x10000, scoped, tag = 'input window, operand 3, single buffered']
    #allocation5 [shape = 's32[1]{0}', space=sflag, size = 0x4, scoped, tag = 'scoped memory for _lambda_.1']
    #allocation6 [shape = 'u8[65536]{0}', space=vmem, size = 0x10000, scoped, tag = 'input window, operand 5, single buffered']
    #allocation7 [shape = 'u8[65536]{0}', space=vmem, size = 0x10000, scoped, tag = 'input window, operand 7, single buffered']
    #allocation8 [shape = 's32[1]{0}', space=sflag, size = 0x4, scoped, tag = 'scoped memory for _lambda_.1']
    #allocation9 [shape = 'u8[65536]{0}', space=vmem, size = 0x10000, scoped, tag = 'input window, operand 9, single buffered']
    #allocation10 [shape = 'u8[65536]{0}', space=vmem, size = 0x10000, scoped, tag = 'input window, operand 11, single buffered']
    #allocation11 [shape = 's32[1]{0}', space=sflag, size = 0x4, scoped, tag = 'scoped memory for _lambda_.1']
    #allocation12 [shape = 'u8[65536]{0}', space=vmem, size = 0x10000, scoped, tag = 'input window, operand 13, single buffered']
    #allocation13 [shape = 'u8[65536]{0}', space=vmem, size = 0x10000, scoped, tag = 'input window, operand 15, single buffered']
    #allocation14 [shape = 's32[1]{0}', space=sflag, size = 0x4, scoped, tag = 'scoped memory for _lambda_.1']
    #allocation15 [shape = 'u8[65536]{0}', space=vmem, size = 0x10000, scoped, tag = 'input window, operand 17, single buffered']
    #allocation16 [shape = 'u8[65536]{0}', space=vmem, size = 0x10000, scoped, tag = 'input window, operand 19, single buffered']
    #allocation17 [shape = 's32[1]{0}', space=sflag, size = 0x4, scoped, tag = 'scoped memory for _lambda_.1']
    %26 = vsyncpa [#allocation3], 0
    %27 = vsyncpa [#allocation5], 0
    %28 = vsyncpa [#allocation8], 0
    %29 = vsyncpa [#allocation11], 0
    %30 = vsyncpa [#allocation14], 0
    %31 = vsyncpa [#allocation17], 0
    // Predicated region
    $region2: #{_lambda_.1} parent=1 // pred_check
      _
    $region3: #{_lambda_.1} parent=1 // pred_check_branch
      %33 = sbr.rel (0) target = $region5
    $region4: #{_lambda_.1} parent=1 // pred_region
      _
    $region5: #{_lambda_.1} parent=1 // pred_fallthru
      _
    // Predicated region
    $region6: #{_lambda_.1} parent=1 // pred_check
      _
    $region7: #{_lambda_.1} parent=1 // pred_check_branch
      %35 = sbr.rel (0) target = $region9
    $region8: #{_lambda_.1} parent=1 // pred_region
      %s37 = ssub.s32 2048, 2048
      %38 = vsyncadd [#allocation3], %s37
      %s39 = sshll.u32 [#allocation2], 4
      %s40 = int_to_ptr.vmem [resolvable:$true] %s39
      %45 = dma.hbm_to_vmem [thread:$0]  %s1, 2048, %s40, [#allocation3], 128, 128, 8
    $region9: #{_lambda_.1} parent=1 // pred_fallthru
      _
    // Predicated region
    $region10: #{_lambda_.1} parent=1 // pred_check
      _
    $region11: #{_lambda_.1} parent=1 // pred_check_branch
      %47 = sbr.rel (0) target = $region13
    $region12: #{_lambda_.1} parent=1 // pred_region
      _
    $region13: #{_lambda_.1} parent=1 // pred_fallthru
      _
    // Predicated region
    $region14: #{_lambda_.1} parent=1 // pred_check
      _
    $region15: #{_lambda_.1} parent=1 // pred_check_branch
      %49 = sbr.rel (0) target = $region17
    $region16: #{_lambda_.1} parent=1 // pred_region
      %s51 = ssub.s32 2048, 2048
      %52 = vsyncadd [#allocation5], %s51
      %s53 = sshll.u32 [#allocation4], 4
      %s54 = int_to_ptr.vmem [resolvable:$true] %s53
      %59 = dma.hbm_to_vmem [thread:$0]  %s3, 2048, %s54, [#allocation5], 128, 128, 8
    $region17: #{_lambda_.1} parent=1 // pred_fallthru
      _
    // Predicated region
    $region18: #{_lambda_.1} parent=1 // pred_check
      _
    $region19: #{_lambda_.1} parent=1 // pred_check_branch
      %61 = sbr.rel (0) target = $region21
    $region20: #{_lambda_.1} parent=1 // pred_region
      _
    $region21: #{_lambda_.1} parent=1 // pred_fallthru
      _
    // Predicated region
    $region22: #{_lambda_.1} parent=1 // pred_check
      _
    $region23: #{_lambda_.1} parent=1 // pred_check_branch
      %63 = sbr.rel (0) target = $region25
    $region24: #{_lambda_.1} parent=1 // pred_region
      %s65 = ssub.s32 2048, 2048
      %66 = vsyncadd [#allocation5], %s65
      %s67 = sshll.u32 [#allocation6], 4
      %s68 = int_to_ptr.vmem [resolvable:$true] %s67
      %73 = dma.hbm_to_vmem [thread:$0]  %s5, 2048, %s68, [#allocation5], 128, 128, 8
    $region25: #{_lambda_.1} parent=1 // pred_fallthru
      _
    // Predicated region
    $region26: #{_lambda_.1} parent=1 // pred_check
      _
    $region27: #{_lambda_.1} parent=1 // pred_check_branch
      %75 = sbr.rel (0) target = $region29
    $region28: #{_lambda_.1} parent=1 // pred_region
      _
    $region29: #{_lambda_.1} parent=1 // pred_fallthru
      _
    // Predicated region
    $region30: #{_lambda_.1} parent=1 // pred_check
      _
    $region31: #{_lambda_.1} parent=1 // pred_check_branch
      %77 = sbr.rel (0) target = $region33
    $region32: #{_lambda_.1} parent=1 // pred_region
      %s79 = ssub.s32 2048, 2048
      %80 = vsyncadd [#allocation8], %s79
      %s81 = sshll.u32 [#allocation7], 4
      %s82 = int_to_ptr.vmem [resolvable:$true] %s81
      %87 = dma.hbm_to_vmem [thread:$0]  %s7, 2048, %s82, [#allocation8], 128, 128, 8
    $region33: #{_lambda_.1} parent=1 // pred_fallthru
      _
    // Predicated region
    $region34: #{_lambda_.1} parent=1 // pred_check
      _
    $region35: #{_lambda_.1} parent=1 // pred_check_branch
      %89 = sbr.rel (0) target = $region37
    $region36: #{_lambda_.1} parent=1 // pred_region
      _
    $region37: #{_lambda_.1} parent=1 // pred_fallthru
      _
    // Predicated region
    $region38: #{_lambda_.1} parent=1 // pred_check
      _
    $region39: #{_lambda_.1} parent=1 // pred_check_branch
      %91 = sbr.rel (0) target = $region41
    $region40: #{_lambda_.1} parent=1 // pred_region
      %s93 = ssub.s32 2048, 2048
      %94 = vsyncadd [#allocation8], %s93
      %s95 = sshll.u32 [#allocation9], 4
      %s96 = int_to_ptr.vmem [resolvable:$true] %s95
      %101 = dma.hbm_to_vmem [thread:$0]  %s9, 2048, %s96, [#allocation8], 128, 128, 8
    $region41: #{_lambda_.1} parent=1 // pred_fallthru
      _
    // Predicated region
    $region42: #{_lambda_.1} parent=1 // pred_check
      _
    $region43: #{_lambda_.1} parent=1 // pred_check_branch
      %103 = sbr.rel (0) target = $region45
    $region44: #{_lambda_.1} parent=1 // pred_region
      _
    $region45: #{_lambda_.1} parent=1 // pred_fallthru
      _
    // Predicated region
    $region46: #{_lambda_.1} parent=1 // pred_check
      _
    $region47: #{_lambda_.1} parent=1 // pred_check_branch
      %105 = sbr.rel (0) target = $region49
    $region48: #{_lambda_.1} parent=1 // pred_region
      %s107 = ssub.s32 2048, 2048
      %108 = vsyncadd [#allocation11], %s107
      %s109 = sshll.u32 [#allocation10], 4
      %s110 = int_to_ptr.vmem [resolvable:$true] %s109
      %115 = dma.hbm_to_vmem [thread:$0]  %s11, 2048, %s110, [#allocation11], 128, 128, 8
    $region49: #{_lambda_.1} parent=1 // pred_fallthru
      _
    // Predicated region
    $region50: #{_lambda_.1} parent=1 // pred_check
      _
    $region51: #{_lambda_.1} parent=1 // pred_check_branch
      %117 = sbr.rel (0) target = $region53
    $region52: #{_lambda_.1} parent=1 // pred_region
      _
    $region53: #{_lambda_.1} parent=1 // pred_fallthru
      _
    // Predicated region
    $region54: #{_lambda_.1} parent=1 // pred_check
      _
    $region55: #{_lambda_.1} parent=1 // pred_check_branch
      %119 = sbr.rel (0) target = $region57
    $region56: #{_lambda_.1} parent=1 // pred_region
      %s121 = ssub.s32 2048, 2048
      %122 = vsyncadd [#allocation11], %s121
      %s123 = sshll.u32 [#allocation12], 4
      %s124 = int_to_ptr.vmem [resolvable:$true] %s123
      %129 = dma.hbm_to_vmem [thread:$0]  %s13, 2048, %s124, [#allocation11], 128, 128, 8
    $region57: #{_lambda_.1} parent=1 // pred_fallthru
      _
    // Predicated region
    $region58: #{_lambda_.1} parent=1 // pred_check
      _
    $region59: #{_lambda_.1} parent=1 // pred_check_branch
      %131 = sbr.rel (0) target = $region61
    $region60: #{_lambda_.1} parent=1 // pred_region
      _
    $region61: #{_lambda_.1} parent=1 // pred_fallthru
      _
    // Predicated region
    $region62: #{_lambda_.1} parent=1 // pred_check
      _
    $region63: #{_lambda_.1} parent=1 // pred_check_branch
      %133 = sbr.rel (0) target = $region65
    $region64: #{_lambda_.1} parent=1 // pred_region
      %s135 = ssub.s32 2048, 2048
      %136 = vsyncadd [#allocation14], %s135
      %s137 = sshll.u32 [#allocation13], 4
      %s138 = int_to_ptr.vmem [resolvable:$true] %s137
      %143 = dma.hbm_to_vmem [thread:$0]  %s15, 2048, %s138, [#allocation14], 128, 128, 8
    $region65: #{_lambda_.1} parent=1 // pred_fallthru
      _
    // Predicated region
    $region66: #{_lambda_.1} parent=1 // pred_check
      _
    $region67: #{_lambda_.1} parent=1 // pred_check_branch
      %145 = sbr.rel (0) target = $region69
    $region68: #{_lambda_.1} parent=1 // pred_region
      _
    $region69: #{_lambda_.1} parent=1 // pred_fallthru
      _
    // Predicated region
    $region70: #{_lambda_.1} parent=1 // pred_check
      _
    $region71: #{_lambda_.1} parent=1 // pred_check_branch
      %147 = sbr.rel (0) target = $region73
    $region72: #{_lambda_.1} parent=1 // pred_region
      %s149 = ssub.s32 2048, 2048
      %150 = vsyncadd [#allocation14], %s149
      %s151 = sshll.u32 [#allocation15], 4
      %s152 = int_to_ptr.vmem [resolvable:$true] %s151
      %157 = dma.hbm_to_vmem [thread:$0]  %s17, 2048, %s152, [#allocation14], 128, 128, 8
    $region73: #{_lambda_.1} parent=1 // pred_fallthru
      _
    // Predicated region
    $region74: #{_lambda_.1} parent=1 // pred_check
      _
    $region75: #{_lambda_.1} parent=1 // pred_check_branch
      %159 = sbr.rel (0) target = $region77
    $region76: #{_lambda_.1} parent=1 // pred_region
      _
    $region77: #{_lambda_.1} parent=1 // pred_fallthru
      _
    // Predicated region
    $region78: #{_lambda_.1} parent=1 // pred_check
      _
    $region79: #{_lambda_.1} parent=1 // pred_check_branch
      %161 = sbr.rel (0) target = $region81
    $region80: #{_lambda_.1} parent=1 // pred_region
      %s163 = ssub.s32 2048, 2048
      %164 = vsyncadd [#allocation17], %s163
      %s165 = sshll.u32 [#allocation16], 4
      %s166 = int_to_ptr.vmem [resolvable:$true] %s165
      %171 = dma.hbm_to_vmem [thread:$0]  %s19, 2048, %s166, [#allocation17], 128, 128, 8
    $region81: #{_lambda_.1} parent=1 // pred_fallthru
      _
    // Predicated region
    $region82: #{_lambda_.1} parent=1 // pred_check
      _
    $region83: #{_lambda_.1} parent=1 // pred_check_branch
      %173 = sbr.rel (0) target = $region85
    $region84: #{_lambda_.1} parent=1 // pred_region
      _
    $region85: #{_lambda_.1} parent=1 // pred_fallthru
      _
    // Predicated region
    $region86: #{_lambda_.1} parent=1 // pred_check
      _
    $region87: #{_lambda_.1} parent=1 // pred_check_branch
      %175 = sbr.rel (0) target = $region89
    $region88: #{_lambda_.1} parent=1 // pred_region
      %176 = dma.done [#allocation3], 2048
    $region89: #{_lambda_.1} parent=1 // pred_fallthru
      _
    // Predicated region
    $region90: #{_lambda_.1} parent=1 // pred_check
      _
    $region91: #{_lambda_.1} parent=1 // pred_check_branch
      %178 = sbr.rel (0) target = $region93
    $region92: #{_lambda_.1} parent=1 // pred_region
      %179 = dma.done [#allocation5], 2048
    $region93: #{_lambda_.1} parent=1 // pred_fallthru
      _
    // Predicated region
    $region94: #{_lambda_.1} parent=1 // pred_check
      _
    $region95: #{_lambda_.1} parent=1 // pred_check_branch
      %181 = sbr.rel (0) target = $region97
    $region96: #{_lambda_.1} parent=1 // pred_region
      %182 = dma.done [#allocation5], 2048
    $region97: #{_lambda_.1} parent=1 // pred_fallthru
      _
    // Predicated region
    $region98: #{_lambda_.1} parent=1 // pred_check
      _
    $region99: #{_lambda_.1} parent=1 // pred_check_branch
      %184 = sbr.rel (0) target = $region101
    $region100: #{_lambda_.1} parent=1 // pred_region
      %185 = dma.done [#allocation8], 2048
    $region101: #{_lambda_.1} parent=1 // pred_fallthru
      _
    // Predicated region
    $region102: #{_lambda_.1} parent=1 // pred_check
      _
    $region103: #{_lambda_.1} parent=1 // pred_check_branch
      %187 = sbr.rel (0) target = $region105
    $region104: #{_lambda_.1} parent=1 // pred_region
      %188 = dma.done [#allocation8], 2048
    $region105: #{_lambda_.1} parent=1 // pred_fallthru
      _
    // Predicated region
    $region106: #{_lambda_.1} parent=1 // pred_check
      _
    $region107: #{_lambda_.1} parent=1 // pred_check_branch
      %190 = sbr.rel (0) target = $region109
    $region108: #{_lambda_.1} parent=1 // pred_region
      %191 = dma.done [#allocation11], 2048
    $region109: #{_lambda_.1} parent=1 // pred_fallthru
      _
    // Predicated region
    $region110: #{_lambda_.1} parent=1 // pred_check
      _
    $region111: #{_lambda_.1} parent=1 // pred_check_branch
      %193 = sbr.rel (0) target = $region113
    $region112: #{_lambda_.1} parent=1 // pred_region
      %194 = dma.done [#allocation11], 2048
    $region113: #{_lambda_.1} parent=1 // pred_fallthru
      _
    // Predicated region
    $region114: #{_lambda_.1} parent=1 // pred_check
      _
    $region115: #{_lambda_.1} parent=1 // pred_check_branch
      %196 = sbr.rel (0) target = $region117
    $region116: #{_lambda_.1} parent=1 // pred_region
      %197 = dma.done [#allocation14], 2048
    $region117: #{_lambda_.1} parent=1 // pred_fallthru
      _
    // Predicated region
    $region118: #{_lambda_.1} parent=1 // pred_check
      _
    $region119: #{_lambda_.1} parent=1 // pred_check_branch
      %199 = sbr.rel (0) target = $region121
    $region120: #{_lambda_.1} parent=1 // pred_region
      %200 = dma.done [#allocation14], 2048
    $region121: #{_lambda_.1} parent=1 // pred_fallthru
      _
    // Predicated region
    $region122: #{_lambda_.1} parent=1 // pred_check
      _
    $region123: #{_lambda_.1} parent=1 // pred_check_branch
      %202 = sbr.rel (0) target = $region125
    $region124: #{_lambda_.1} parent=1 // pred_region
      %203 = dma.done [#allocation17], 2048
    $region125: #{_lambda_.1} parent=1 // pred_fallthru
      _
    %v204 = vld [vmem:[%s0] sm:$0xff]
    %v205 = vld [vmem:[#allocation2] sm:$0xff]
    %v206 = vld [vmem:[#allocation2 + $0x8] sm:$0xff]
    %v207 = vld [vmem:[#allocation2 + $0x10] sm:$0xff]
    %v208 = vld [vmem:[#allocation2 + $0x18] sm:$0xff]
    %v209 = vld [vmem:[#allocation2 + $0x20] sm:$0xff]
    %v210 = vld [vmem:[#allocation2 + $0x28] sm:$0xff]
    %v211 = vld [vmem:[#allocation2 + $0x30] sm:$0xff]
    %v212 = vld [vmem:[#allocation2 + $0x38] sm:$0xff]
    %v213 = vld [vmem:[#allocation2 + $0x40] sm:$0xff]
    %v214 = vld [vmem:[#allocation2 + $0x48] sm:$0xff]
    %v215 = vld [vmem:[#allocation2 + $0x50] sm:$0xff]
    %v216 = vld [vmem:[#allocation2 + $0x58] sm:$0xff]
    %v217 = vld [vmem:[#allocation2 + $0x60] sm:$0xff]
    %v218 = vld [vmem:[#allocation2 + $0x68] sm:$0xff]
    %v219 = vld [vmem:[#allocation2 + $0x70] sm:$0xff]
    %v220 = vld [vmem:[#allocation2 + $0x78] sm:$0xff]
    %v221 = vld [vmem:[%s2] sm:$0x7]
    %v222 = vlaneseq
    %v223 = vshrl.u32 %v222, 7
    %v224 = vsub.s32 0, %v223
    %v225 = vrot.slane %v221, %v224
    %226 = vmatprep.subr.mxu0 0.0
    %227 = vmatpush1.msra.mxu0 %v205
    %228 = vmatprep.subr.mxu0 0.0
    %229 = vmatpush1.msra.mxu0 %v206
    %230 = vmatprep.subr.mxu0 0.0
    %231 = vmatpush1.msra.mxu0 %v207
    %232 = vmatprep.subr.mxu0 0.0
    %233 = vmatpush1.msra.mxu0 %v208
    %234 = vmatprep.subr.mxu0 0.0
    %235 = vmatpush1.msra.mxu0 %v209
    %236 = vmatprep.subr.mxu0 0.0
    %237 = vmatpush1.msra.mxu0 %v210
    %238 = vmatprep.subr.mxu0 0.0
    %239 = vmatpush1.msra.mxu0 %v211
    %240 = vmatprep.subr.mxu0 0.0
    %241 = vmatpush1.msra.mxu0 %v212
    %242 = vmatprep.subr.mxu0 0.0
    %243 = vmatpush1.msra.mxu0 %v213
    %244 = vmatprep.subr.mxu0 0.0
    %245 = vmatpush1.msra.mxu0 %v214
    %246 = vmatprep.subr.mxu0 0.0
    %247 = vmatpush1.msra.mxu0 %v215
    %248 = vmatprep.subr.mxu0 0.0
    %249 = vmatpush1.msra.mxu0 %v216
    %250 = vmatprep.subr.mxu0 0.0
    %251 = vmatpush1.msra.mxu0 %v217
    %252 = vmatprep.subr.mxu0 0.0
    %253 = vmatpush1.msra.mxu0 %v218
    %254 = vmatprep.subr.mxu0 0.0
    %255 = vmatpush1.msra.mxu0 %v219
    %256 = vmatprep.subr.mxu0 0.0
    %257 = vmatpush1.msra.mxu0 %v220
    %258 = vmatprep.subr.mxu0 0.0
    %259 = vmatpush1.msra.mxu0 0.0
    %260 = vmatprep.subr.mxu0 0.0
    %261 = vmatpush1.msra.mxu0 0.0
    %262 = vmatprep.subr.mxu0 0.0
    %263 = vmatpush1.msra.mxu0 0.0
    %264 = vmatprep.subr.mxu0 0.0
    %265 = vmatpush1.msra.mxu0 0.0
    %266 = vmatprep.subr.mxu0 0.0
    %267 = vmatpush1.msra.mxu0 0.0
    %268 = vmatprep.subr.mxu0 0.0
    %269 = vmatpush1.msra.mxu0 0.0
    %270 = vmatprep.subr.mxu0 0.0
    %271 = vmatpush1.msra.mxu0 0.0
    %272 = vmatprep.subr.mxu0 0.0
    %273 = vmatpush1.msra.mxu0 0.0
    %274 = vmatprep.subr.mxu0 0.0
    %275 = vmatpush1.msra.mxu0 0.0
    %276 = vmatprep.subr.mxu0 0.0
    %277 = vmatpush1.msra.mxu0 0.0
    %278 = vmatprep.subr.mxu0 0.0
    %279 = vmatpush1.msra.mxu0 0.0
    %280 = vmatprep.subr.mxu0 0.0
    %281 = vmatpush1.msra.mxu0 0.0
    %282 = vmatprep.subr.mxu0 0.0
    %283 = vmatpush1.msra.mxu0 0.0
    %284 = vmatprep.subr.mxu0 0.0
    %285 = vmatpush1.msra.mxu0 0.0
    %286 = vmatprep.subr.mxu0 0.0
    %287 = vmatpush1.msra.mxu0 0.0
    %288 = vmatprep.subr.mxu0 0.0
    %289 = vmatpush1.msra.mxu0 0.0
    %290 = vmatprep.mubr.f32.mxu0 0.0
    %291 = vmatmul.mubr.f32.gmra.mrb[0].mxu0 %v204
    %v292 = vpop.f32.mrb[0].mxu0
    %v293 = vadd.f32 %v225, %v292
    %v294 = vpop.f32.mrb[0].mxu0
    %295 = vdwg.mxu0
    %v296 = vmax.f32 %v293, 0.0
    %297 = vadd.xlane.f32.xlu0 %v296
    %v298 = vpop.xlane.xlu0 %297
    %v299 = vmul.f32 %v298, 0.03125
    %v300 = vmul.f32 %v296, %v296
    %301 = vadd.xlane.f32.xlu0 %v300
    %v302 = vpop.xlane.xlu0 %301
    %v303 = vmul.f32 %v302, 0.03125
    %v304 = vmul.f32 %v299, %v299
    %v305 = vsub.f32 %v303, %v304
    %v306 = vadd.f32 %v305, 1e-05
    %v307 = vrsqrt.pop %v306
    %v308 = vlaneseq
    %v309 = vshrl.u32 %v308, 7
    %v310 = vsub.s32 1, %v309
    %v311 = vrot.slane %v221, %v310
    %v312 = vmul.f32 %v307, %v311
    %v313 = vmul.f32 %v296, %v312
    %v314 = vmul.f32 %v299, %v312
    %v315 = vlaneseq
    %v316 = vshrl.u32 %v315, 7
    %v317 = vsub.s32 2, %v316
    %v318 = vrot.slane %v221, %v317
    %v319 = vsub.f32 %v318, %v314
    %v320 = vadd.f32 %v313, %v319
    %v321 = vld [vmem:[#allocation4] sm:$0xff]
    %v322 = vld [vmem:[#allocation4 + $0x8] sm:$0xff]
    %v323 = vld [vmem:[#allocation4 + $0x10] sm:$0xff]
    %v324 = vld [vmem:[#allocation4 + $0x18] sm:$0xff]
    %v325 = vld [vmem:[#allocation4 + $0x20] sm:$0xff]
    %v326 = vld [vmem:[#allocation4 + $0x28] sm:$0xff]
    %v327 = vld [vmem:[#allocation4 + $0x30] sm:$0xff]
    %v328 = vld [vmem:[#allocation4 + $0x38] sm:$0xff]
    %v329 = vld [vmem:[#allocation4 + $0x40] sm:$0xff]
    %v330 = vld [vmem:[#allocation4 + $0x48] sm:$0xff]
    %v331 = vld [vmem:[#allocation4 + $0x50] sm:$0xff]
    %v332 = vld [vmem:[#allocation4 + $0x58] sm:$0xff]
    %v333 = vld [vmem:[#allocation4 + $0x60] sm:$0xff]
    %v334 = vld [vmem:[#allocation4 + $0x68] sm:$0xff]
    %v335 = vld [vmem:[#allocation4 + $0x70] sm:$0xff]
    %v336 = vld [vmem:[#allocation4 + $0x78] sm:$0xff]
    %v337 = vld [vmem:[%s4] sm:$0x7]
    %v338 = vlaneseq
    %v339 = vshrl.u32 %v338, 7
    %v340 = vsub.s32 0, %v339
    %v341 = vrot.slane %v337, %v340
    %342 = vmatprep.subr.mxu0 0.0
    %343 = vmatpush1.msra.mxu0 %v321
    %344 = vmatprep.subr.mxu0 0.0
    %345 = vmatpush1.msra.mxu0 %v322
    %346 = vmatprep.subr.mxu0 0.0
    %347 = vmatpush1.msra.mxu0 %v323
    %348 = vmatprep.subr.mxu0 0.0
    %349 = vmatpush1.msra.mxu0 %v324
    %350 = vmatprep.subr.mxu0 0.0
    %351 = vmatpush1.msra.mxu0 %v325
    %352 = vmatprep.subr.mxu0 0.0
    %353 = vmatpush1.msra.mxu0 %v326
    %354 = vmatprep.subr.mxu0 0.0
    %355 = vmatpush1.msra.mxu0 %v327
    %356 = vmatprep.subr.mxu0 0.0
    %357 = vmatpush1.msra.mxu0 %v328
    %358 = vmatprep.subr.mxu0 0.0
    %359 = vmatpush1.msra.mxu0 %v329
    %360 = vmatprep.subr.mxu0 0.0
    %361 = vmatpush1.msra.mxu0 %v330
    %362 = vmatprep.subr.mxu0 0.0
    %363 = vmatpush1.msra.mxu0 %v331
    %364 = vmatprep.subr.mxu0 0.0
    %365 = vmatpush1.msra.mxu0 %v332
    %366 = vmatprep.subr.mxu0 0.0
    %367 = vmatpush1.msra.mxu0 %v333
    %368 = vmatprep.subr.mxu0 0.0
    %369 = vmatpush1.msra.mxu0 %v334
    %370 = vmatprep.subr.mxu0 0.0
    %371 = vmatpush1.msra.mxu0 %v335
    %372 = vmatprep.subr.mxu0 0.0
    %373 = vmatpush1.msra.mxu0 %v336
    %374 = vmatprep.subr.mxu0 0.0
    %375 = vmatpush1.msra.mxu0 0.0
    %376 = vmatprep.subr.mxu0 0.0
    %377 = vmatpush1.msra.mxu0 0.0
    %378 = vmatprep.subr.mxu0 0.0
    %379 = vmatpush1.msra.mxu0 0.0
    %380 = vmatprep.subr.mxu0 0.0
    %381 = vmatpush1.msra.mxu0 0.0
    %382 = vmatprep.subr.mxu0 0.0
    %383 = vmatpush1.msra.mxu0 0.0
    %384 = vmatprep.subr.mxu0 0.0
    %385 = vmatpush1.msra.mxu0 0.0
    %386 = vmatprep.subr.mxu0 0.0
    %387 = vmatpush1.msra.mxu0 0.0
    %388 = vmatprep.subr.mxu0 0.0
    %389 = vmatpush1.msra.mxu0 0.0
    %390 = vmatprep.subr.mxu0 0.0
    %391 = vmatpush1.msra.mxu0 0.0
    %392 = vmatprep.subr.mxu0 0.0
    %393 = vmatpush1.msra.mxu0 0.0
    %394 = vmatprep.subr.mxu0 0.0
    %395 = vmatpush1.msra.mxu0 0.0
    %396 = vmatprep.subr.mxu0 0.0
    %397 = vmatpush1.msra.mxu0 0.0
    %398 = vmatprep.subr.mxu0 0.0
    %399 = vmatpush1.msra.mxu0 0.0
    %400 = vmatprep.subr.mxu0 0.0
    %401 = vmatpush1.msra.mxu0 0.0
    %402 = vmatprep.subr.mxu0 0.0
    %403 = vmatpush1.msra.mxu0 0.0
    %404 = vmatprep.subr.mxu0 0.0
    %405 = vmatpush1.msra.mxu0 0.0
    %406 = vmatprep.mubr.f32.mxu0 0.0
    %407 = vmatmul.mubr.f32.gmra.mrb[0].mxu0 %v320
    %v408 = vpop.f32.mrb[0].mxu0
    %v409 = vadd.f32 %v341, %v408
    %v410 = vpop.f32.mrb[0].mxu0
    %411 = vdwg.mxu0
    %v412 = vmax.f32 %v409, 0.0
    %413 = vadd.xlane.f32.xlu0 %v412
    %v414 = vpop.xlane.xlu0 %413
    %v415 = vmul.f32 %v414, 0.03125
    %v416 = vmul.f32 %v412, %v412
    %417 = vadd.xlane.f32.xlu0 %v416
    %v418 = vpop.xlane.xlu0 %417
    %v419 = vmul.f32 %v418, 0.03125
    %v420 = vmul.f32 %v415, %v415
    %v421 = vsub.f32 %v419, %v420
    %v422 = vadd.f32 %v421, 1e-05
    %v423 = vrsqrt.pop %v422
    %v424 = vlaneseq
    %v425 = vshrl.u32 %v424, 7
    %v426 = vsub.s32 1, %v425
    %v427 = vrot.slane %v337, %v426
    %v428 = vmul.f32 %v423, %v427
    %v429 = vmul.f32 %v412, %v428
    %v430 = vmul.f32 %v415, %v428
    %v431 = vlaneseq
    %v432 = vshrl.u32 %v431, 7
    %v433 = vsub.s32 2, %v432
    %v434 = vrot.slane %v337, %v433
    %v435 = vsub.f32 %v434, %v430
    %v436 = vadd.f32 %v429, %v435
    %v437 = vld [vmem:[#allocation6] sm:$0xff]
    %v438 = vld [vmem:[#allocation6 + $0x8] sm:$0xff]
    %v439 = vld [vmem:[#allocation6 + $0x10] sm:$0xff]
    %v440 = vld [vmem:[#allocation6 + $0x18] sm:$0xff]
    %v441 = vld [vmem:[#allocation6 + $0x20] sm:$0xff]
    %v442 = vld [vmem:[#allocation6 + $0x28] sm:$0xff]
    %v443 = vld [vmem:[#allocation6 + $0x30] sm:$0xff]
    %v444 = vld [vmem:[#allocation6 + $0x38] sm:$0xff]
    %v445 = vld [vmem:[#allocation6 + $0x40] sm:$0xff]
    %v446 = vld [vmem:[#allocation6 + $0x48] sm:$0xff]
    %v447 = vld [vmem:[#allocation6 + $0x50] sm:$0xff]
    %v448 = vld [vmem:[#allocation6 + $0x58] sm:$0xff]
    %v449 = vld [vmem:[#allocation6 + $0x60] sm:$0xff]
    %v450 = vld [vmem:[#allocation6 + $0x68] sm:$0xff]
    %v451 = vld [vmem:[#allocation6 + $0x70] sm:$0xff]
    %v452 = vld [vmem:[#allocation6 + $0x78] sm:$0xff]
    %v453 = vld [vmem:[%s6] sm:$0x7]
    %v454 = vlaneseq
    %v455 = vshrl.u32 %v454, 7
    %v456 = vsub.s32 0, %v455
    %v457 = vrot.slane %v453, %v456
    %458 = vmatprep.subr.mxu0 0.0
    %459 = vmatpush1.msra.mxu0 %v437
    %460 = vmatprep.subr.mxu0 0.0
    %461 = vmatpush1.msra.mxu0 %v438
    %462 = vmatprep.subr.mxu0 0.0
    %463 = vmatpush1.msra.mxu0 %v439
    %464 = vmatprep.subr.mxu0 0.0
    %465 = vmatpush1.msra.mxu0 %v440
    %466 = vmatprep.subr.mxu0 0.0
    %467 = vmatpush1.msra.mxu0 %v441
    %468 = vmatprep.subr.mxu0 0.0
    %469 = vmatpush1.msra.mxu0 %v442
    %470 = vmatprep.subr.mxu0 0.0
    %471 = vmatpush1.msra.mxu0 %v443
    %472 = vmatprep.subr.mxu0 0.0
    %473 = vmatpush1.msra.mxu0 %v444
    %474 = vmatprep.subr.mxu0 0.0
    %475 = vmatpush1.msra.mxu0 %v445
    %476 = vmatprep.subr.mxu0 0.0
    %477 = vmatpush1.msra.mxu0 %v446
    %478 = vmatprep.subr.mxu0 0.0
    %479 = vmatpush1.msra.mxu0 %v447
    %480 = vmatprep.subr.mxu0 0.0
    %481 = vmatpush1.msra.mxu0 %v448
    %482 = vmatprep.subr.mxu0 0.0
    %483 = vmatpush1.msra.mxu0 %v449
    %484 = vmatprep.subr.mxu0 0.0
    %485 = vmatpush1.msra.mxu0 %v450
    %486 = vmatprep.subr.mxu0 0.0
    %487 = vmatpush1.msra.mxu0 %v451
    %488 = vmatprep.subr.mxu0 0.0
    %489 = vmatpush1.msra.mxu0 %v452
    %490 = vmatprep.subr.mxu0 0.0
    %491 = vmatpush1.msra.mxu0 0.0
    %492 = vmatprep.subr.mxu0 0.0
    %493 = vmatpush1.msra.mxu0 0.0
    %494 = vmatprep.subr.mxu0 0.0
    %495 = vmatpush1.msra.mxu0 0.0
    %496 = vmatprep.subr.mxu0 0.0
    %497 = vmatpush1.msra.mxu0 0.0
    %498 = vmatprep.subr.mxu0 0.0
    %499 = vmatpush1.msra.mxu0 0.0
    %500 = vmatprep.subr.mxu0 0.0
    %501 = vmatpush1.msra.mxu0 0.0
    %502 = vmatprep.subr.mxu0 0.0
    %503 = vmatpush1.msra.mxu0 0.0
    %504 = vmatprep.subr.mxu0 0.0
    %505 = vmatpush1.msra.mxu0 0.0
    %506 = vmatprep.subr.mxu0 0.0
    %507 = vmatpush1.msra.mxu0 0.0
    %508 = vmatprep.subr.mxu0 0.0
    %509 = vmatpush1.msra.mxu0 0.0
    %510 = vmatprep.subr.mxu0 0.0
    %511 = vmatpush1.msra.mxu0 0.0
    %512 = vmatprep.subr.mxu0 0.0
    %513 = vmatpush1.msra.mxu0 0.0
    %514 = vmatprep.subr.mxu0 0.0
    %515 = vmatpush1.msra.mxu0 0.0
    %516 = vmatprep.subr.mxu0 0.0
    %517 = vmatpush1.msra.mxu0 0.0
    %518 = vmatprep.subr.mxu0 0.0
    %519 = vmatpush1.msra.mxu0 0.0
    %520 = vmatprep.subr.mxu0 0.0
    %521 = vmatpush1.msra.mxu0 0.0
    %522 = vmatprep.mubr.f32.mxu0 0.0
    %523 = vmatmul.mubr.f32.gmra.mrb[0].mxu0 %v436
    %v524 = vpop.f32.mrb[0].mxu0
    %v525 = vadd.f32 %v457, %v524
    %v526 = vpop.f32.mrb[0].mxu0
    %527 = vdwg.mxu0
    %v528 = vmax.f32 %v525, 0.0
    %529 = vadd.xlane.f32.xlu0 %v528
    %v530 = vpop.xlane.xlu0 %529
    %v531 = vmul.f32 %v530, 0.03125
    %v532 = vmul.f32 %v528, %v528
    %533 = vadd.xlane.f32.xlu0 %v532
    %v534 = vpop.xlane.xlu0 %533
    %v535 = vmul.f32 %v534, 0.03125
    %v536 = vmul.f32 %v531, %v531
    %v537 = vsub.f32 %v535, %v536
    %v538 = vadd.f32 %v537, 1e-05
    %v539 = vrsqrt.pop %v538
    %v540 = vlaneseq
    %v541 = vshrl.u32 %v540, 7
    %v542 = vsub.s32 1, %v541
    %v543 = vrot.slane %v453, %v542
    %v544 = vmul.f32 %v539, %v543
    %v545 = vmul.f32 %v528, %v544
    %v546 = vmul.f32 %v531, %v544
    %v547 = vlaneseq
    %v548 = vshrl.u32 %v547, 7
    %v549 = vsub.s32 2, %v548
    %v550 = vrot.slane %v453, %v549
    %v551 = vsub.f32 %v550, %v546
    %v552 = vadd.f32 %v545, %v551
    %v553 = vld [vmem:[#allocation7] sm:$0xff]
    %v554 = vld [vmem:[#allocation7 + $0x8] sm:$0xff]
    %v555 = vld [vmem:[#allocation7 + $0x10] sm:$0xff]
    %v556 = vld [vmem:[#allocation7 + $0x18] sm:$0xff]
    %v557 = vld [vmem:[#allocation7 + $0x20] sm:$0xff]
    %v558 = vld [vmem:[#allocation7 + $0x28] sm:$0xff]
    %v559 = vld [vmem:[#allocation7 + $0x30] sm:$0xff]
    %v560 = vld [vmem:[#allocation7 + $0x38] sm:$0xff]
    %v561 = vld [vmem:[#allocation7 + $0x40] sm:$0xff]
    %v562 = vld [vmem:[#allocation7 + $0x48] sm:$0xff]
    %v563 = vld [vmem:[#allocation7 + $0x50] sm:$0xff]
    %v564 = vld [vmem:[#allocation7 + $0x58] sm:$0xff]
    %v565 = vld [vmem:[#allocation7 + $0x60] sm:$0xff]
    %v566 = vld [vmem:[#allocation7 + $0x68] sm:$0xff]
    %v567 = vld [vmem:[#allocation7 + $0x70] sm:$0xff]
    %v568 = vld [vmem:[#allocation7 + $0x78] sm:$0xff]
    %v569 = vld [vmem:[%s8] sm:$0x7]
    %v570 = vlaneseq
    %v571 = vshrl.u32 %v570, 7
    %v572 = vsub.s32 0, %v571
    %v573 = vrot.slane %v569, %v572
    %574 = vmatprep.subr.mxu0 0.0
    %575 = vmatpush1.msra.mxu0 %v553
    %576 = vmatprep.subr.mxu0 0.0
    %577 = vmatpush1.msra.mxu0 %v554
    %578 = vmatprep.subr.mxu0 0.0
    %579 = vmatpush1.msra.mxu0 %v555
    %580 = vmatprep.subr.mxu0 0.0
    %581 = vmatpush1.msra.mxu0 %v556
    %582 = vmatprep.subr.mxu0 0.0
    %583 = vmatpush1.msra.mxu0 %v557
    %584 = vmatprep.subr.mxu0 0.0
    %585 = vmatpush1.msra.mxu0 %v558
    %586 = vmatprep.subr.mxu0 0.0
    %587 = vmatpush1.msra.mxu0 %v559
    %588 = vmatprep.subr.mxu0 0.0
    %589 = vmatpush1.msra.mxu0 %v560
    %590 = vmatprep.subr.mxu0 0.0
    %591 = vmatpush1.msra.mxu0 %v561
    %592 = vmatprep.subr.mxu0 0.0
    %593 = vmatpush1.msra.mxu0 %v562
    %594 = vmatprep.subr.mxu0 0.0
    %595 = vmatpush1.msra.mxu0 %v563
    %596 = vmatprep.subr.mxu0 0.0
    %597 = vmatpush1.msra.mxu0 %v564
    %598 = vmatprep.subr.mxu0 0.0
    %599 = vmatpush1.msra.mxu0 %v565
    %600 = vmatprep.subr.mxu0 0.0
    %601 = vmatpush1.msra.mxu0 %v566
    %602 = vmatprep.subr.mxu0 0.0
    %603 = vmatpush1.msra.mxu0 %v567
    %604 = vmatprep.subr.mxu0 0.0
    %605 = vmatpush1.msra.mxu0 %v568
    %606 = vmatprep.subr.mxu0 0.0
    %607 = vmatpush1.msra.mxu0 0.0
    %608 = vmatprep.subr.mxu0 0.0
    %609 = vmatpush1.msra.mxu0 0.0
    %610 = vmatprep.subr.mxu0 0.0
    %611 = vmatpush1.msra.mxu0 0.0
    %612 = vmatprep.subr.mxu0 0.0
    %613 = vmatpush1.msra.mxu0 0.0
    %614 = vmatprep.subr.mxu0 0.0
    %615 = vmatpush1.msra.mxu0 0.0
    %616 = vmatprep.subr.mxu0 0.0
    %617 = vmatpush1.msra.mxu0 0.0
    %618 = vmatprep.subr.mxu0 0.0
    %619 = vmatpush1.msra.mxu0 0.0
    %620 = vmatprep.subr.mxu0 0.0
    %621 = vmatpush1.msra.mxu0 0.0
    %622 = vmatprep.subr.mxu0 0.0
    %623 = vmatpush1.msra.mxu0 0.0
    %624 = vmatprep.subr.mxu0 0.0
    %625 = vmatpush1.msra.mxu0 0.0
    %626 = vmatprep.subr.mxu0 0.0
    %627 = vmatpush1.msra.mxu0 0.0
    %628 = vmatprep.subr.mxu0 0.0
    %629 = vmatpush1.msra.mxu0 0.0
    %630 = vmatprep.subr.mxu0 0.0
    %631 = vmatpush1.msra.mxu0 0.0
    %632 = vmatprep.subr.mxu0 0.0
    %633 = vmatpush1.msra.mxu0 0.0
    %634 = vmatprep.subr.mxu0 0.0
    %635 = vmatpush1.msra.mxu0 0.0
    %636 = vmatprep.subr.mxu0 0.0
    %637 = vmatpush1.msra.mxu0 0.0
    %638 = vmatprep.mubr.f32.mxu0 0.0
    %639 = vmatmul.mubr.f32.gmra.mrb[0].mxu0 %v552
    %v640 = vpop.f32.mrb[0].mxu0
    %v641 = vadd.f32 %v573, %v640
    %v642 = vpop.f32.mrb[0].mxu0
    %643 = vdwg.mxu0
    %v644 = vmax.f32 %v641, 0.0
    %645 = vadd.xlane.f32.xlu0 %v644
    %v646 = vpop.xlane.xlu0 %645
    %v647 = vmul.f32 %v646, 0.03125
    %v648 = vmul.f32 %v644, %v644
    %649 = vadd.xlane.f32.xlu0 %v648
    %v650 = vpop.xlane.xlu0 %649
    %v651 = vmul.f32 %v650, 0.03125
    %v652 = vmul.f32 %v647, %v647
    %v653 = vsub.f32 %v651, %v652
    %v654 = vadd.f32 %v653, 1e-05
    %v655 = vrsqrt.pop %v654
    %v656 = vlaneseq
    %v657 = vshrl.u32 %v656, 7
    %v658 = vsub.s32 1, %v657
    %v659 = vrot.slane %v569, %v658
    %v660 = vmul.f32 %v655, %v659
    %v661 = vmul.f32 %v644, %v660
    %v662 = vmul.f32 %v647, %v660
    %v663 = vlaneseq
    %v664 = vshrl.u32 %v663, 7
    %v665 = vsub.s32 2, %v664
    %v666 = vrot.slane %v569, %v665
    %v667 = vsub.f32 %v666, %v662
    %v668 = vadd.f32 %v661, %v667
    %v669 = vld [vmem:[#allocation9] sm:$0xff]
    %v670 = vld [vmem:[#allocation9 + $0x8] sm:$0xff]
    %v671 = vld [vmem:[#allocation9 + $0x10] sm:$0xff]
    %v672 = vld [vmem:[#allocation9 + $0x18] sm:$0xff]
    %v673 = vld [vmem:[#allocation9 + $0x20] sm:$0xff]
    %v674 = vld [vmem:[#allocation9 + $0x28] sm:$0xff]
    %v675 = vld [vmem:[#allocation9 + $0x30] sm:$0xff]
    %v676 = vld [vmem:[#allocation9 + $0x38] sm:$0xff]
    %v677 = vld [vmem:[#allocation9 + $0x40] sm:$0xff]
    %v678 = vld [vmem:[#allocation9 + $0x48] sm:$0xff]
    %v679 = vld [vmem:[#allocation9 + $0x50] sm:$0xff]
    %v680 = vld [vmem:[#allocation9 + $0x58] sm:$0xff]
    %v681 = vld [vmem:[#allocation9 + $0x60] sm:$0xff]
    %v682 = vld [vmem:[#allocation9 + $0x68] sm:$0xff]
    %v683 = vld [vmem:[#allocation9 + $0x70] sm:$0xff]
    %v684 = vld [vmem:[#allocation9 + $0x78] sm:$0xff]
    %v685 = vld [vmem:[%s10] sm:$0x1]
    %v687 = vlaneseq
    %v688 = vshrl.u32 %v687, 7
    %v689 = vsub.s32 0, %v688
    %v690 = vrot.slane %v685, %v689
    %692 = vmatprep.subr.mxu0 0.0
    %693 = vmatpush1.msra.mxu0 %v669
    %694 = vmatprep.subr.mxu0 0.0
    %695 = vmatpush1.msra.mxu0 %v670
    %696 = vmatprep.subr.mxu0 0.0
    %697 = vmatpush1.msra.mxu0 %v671
    %698 = vmatprep.subr.mxu0 0.0
    %699 = vmatpush1.msra.mxu0 %v672
    %700 = vmatprep.subr.mxu0 0.0
    %701 = vmatpush1.msra.mxu0 %v673
    %702 = vmatprep.subr.mxu0 0.0
    %703 = vmatpush1.msra.mxu0 %v674
    %704 = vmatprep.subr.mxu0 0.0
    %705 = vmatpush1.msra.mxu0 %v675
    %706 = vmatprep.subr.mxu0 0.0
    %707 = vmatpush1.msra.mxu0 %v676
    %708 = vmatprep.subr.mxu0 0.0
    %709 = vmatpush1.msra.mxu0 %v677
    %710 = vmatprep.subr.mxu0 0.0
    %711 = vmatpush1.msra.mxu0 %v678
    %712 = vmatprep.subr.mxu0 0.0
    %713 = vmatpush1.msra.mxu0 %v679
    %714 = vmatprep.subr.mxu0 0.0
    %715 = vmatpush1.msra.mxu0 %v680
    %716 = vmatprep.subr.mxu0 0.0
    %717 = vmatpush1.msra.mxu0 %v681
    %718 = vmatprep.subr.mxu0 0.0
    %719 = vmatpush1.msra.mxu0 %v682
    %720 = vmatprep.subr.mxu0 0.0
    %721 = vmatpush1.msra.mxu0 %v683
    %722 = vmatprep.subr.mxu0 0.0
    %723 = vmatpush1.msra.mxu0 %v684
    %724 = vmatprep.subr.mxu0 0.0
    %725 = vmatpush1.msra.mxu0 0.0
    %726 = vmatprep.subr.mxu0 0.0
    %727 = vmatpush1.msra.mxu0 0.0
    %728 = vmatprep.subr.mxu0 0.0
    %729 = vmatpush1.msra.mxu0 0.0
    %730 = vmatprep.subr.mxu0 0.0
    %731 = vmatpush1.msra.mxu0 0.0
    %732 = vmatprep.subr.mxu0 0.0
    %733 = vmatpush1.msra.mxu0 0.0
    %734 = vmatprep.subr.mxu0 0.0
    %735 = vmatpush1.msra.mxu0 0.0
    %736 = vmatprep.subr.mxu0 0.0
    %737 = vmatpush1.msra.mxu0 0.0
    %738 = vmatprep.subr.mxu0 0.0
    %739 = vmatpush1.msra.mxu0 0.0
    %740 = vmatprep.subr.mxu0 0.0
    %741 = vmatpush1.msra.mxu0 0.0
    %742 = vmatprep.subr.mxu0 0.0
    %743 = vmatpush1.msra.mxu0 0.0
    %744 = vmatprep.subr.mxu0 0.0
    %745 = vmatpush1.msra.mxu0 0.0
    %746 = vmatprep.subr.mxu0 0.0
    %747 = vmatpush1.msra.mxu0 0.0
    %748 = vmatprep.subr.mxu0 0.0
    %749 = vmatpush1.msra.mxu0 0.0
    %750 = vmatprep.subr.mxu0 0.0
    %751 = vmatpush1.msra.mxu0 0.0
    %752 = vmatprep.subr.mxu0 0.0
    %753 = vmatpush1.msra.mxu0 0.0
    %754 = vmatprep.subr.mxu0 0.0
    %755 = vmatpush1.msra.mxu0 0.0
    %756 = vmatprep.mubr.f32.mxu0 0.0
    %757 = vmatmul.mubr.f32.gmra.mrb[0].mxu0 %v204
    %v758 = vpop.f32.mrb[0].mxu0
    %v759 = vadd.f32 %v690, %v758
    %v760 = vpop.f32.mrb[0].mxu0
    %761 = vdwg.mxu0
    %v762 = vadd.f32 %v759, %v668
    %v763 = vmax.f32 %v762, 0.0
    %v764 = vld [vmem:[#allocation10] sm:$0xff]
    %v765 = vld [vmem:[#allocation10 + $0x8] sm:$0xff]
    %v766 = vld [vmem:[#allocation10 + $0x10] sm:$0xff]
    %v767 = vld [vmem:[#allocation10 + $0x18] sm:$0xff]
    %v768 = vld [vmem:[#allocation10 + $0x20] sm:$0xff]
    %v769 = vld [vmem:[#allocation10 + $0x28] sm:$0xff]
    %v770 = vld [vmem:[#allocation10 + $0x30] sm:$0xff]
    %v771 = vld [vmem:[#allocation10 + $0x38] sm:$0xff]
    %v772 = vld [vmem:[#allocation10 + $0x40] sm:$0xff]
    %v773 = vld [vmem:[#allocation10 + $0x48] sm:$0xff]
    %v774 = vld [vmem:[#allocation10 + $0x50] sm:$0xff]
    %v775 = vld [vmem:[#allocation10 + $0x58] sm:$0xff]
    %v776 = vld [vmem:[#allocation10 + $0x60] sm:$0xff]
    %v777 = vld [vmem:[#allocation10 + $0x68] sm:$0xff]
    %v778 = vld [vmem:[#allocation10 + $0x70] sm:$0xff]
    %v779 = vld [vmem:[#allocation10 + $0x78] sm:$0xff]
    %v780 = vld [vmem:[%s12] sm:$0x7]
    %v781 = vlaneseq
    %v782 = vshrl.u32 %v781, 7
    %v783 = vsub.s32 0, %v782
    %v784 = vrot.slane %v780, %v783
    %785 = vmatprep.subr.mxu0 0.0
    %786 = vmatpush1.msra.mxu0 %v764
    %787 = vmatprep.subr.mxu0 0.0
    %788 = vmatpush1.msra.mxu0 %v765
    %789 = vmatprep.subr.mxu0 0.0
    %790 = vmatpush1.msra.mxu0 %v766
    %791 = vmatprep.subr.mxu0 0.0
    %792 = vmatpush1.msra.mxu0 %v767
    %793 = vmatprep.subr.mxu0 0.0
    %794 = vmatpush1.msra.mxu0 %v768
    %795 = vmatprep.subr.mxu0 0.0
    %796 = vmatpush1.msra.mxu0 %v769
    %797 = vmatprep.subr.mxu0 0.0
    %798 = vmatpush1.msra.mxu0 %v770
    %799 = vmatprep.subr.mxu0 0.0
    %800 = vmatpush1.msra.mxu0 %v771
    %801 = vmatprep.subr.mxu0 0.0
    %802 = vmatpush1.msra.mxu0 %v772
    %803 = vmatprep.subr.mxu0 0.0
    %804 = vmatpush1.msra.mxu0 %v773
    %805 = vmatprep.subr.mxu0 0.0
    %806 = vmatpush1.msra.mxu0 %v774
    %807 = vmatprep.subr.mxu0 0.0
    %808 = vmatpush1.msra.mxu0 %v775
    %809 = vmatprep.subr.mxu0 0.0
    %810 = vmatpush1.msra.mxu0 %v776
    %811 = vmatprep.subr.mxu0 0.0
    %812 = vmatpush1.msra.mxu0 %v777
    %813 = vmatprep.subr.mxu0 0.0
    %814 = vmatpush1.msra.mxu0 %v778
    %815 = vmatprep.subr.mxu0 0.0
    %816 = vmatpush1.msra.mxu0 %v779
    %817 = vmatprep.subr.mxu0 0.0
    %818 = vmatpush1.msra.mxu0 0.0
    %819 = vmatprep.subr.mxu0 0.0
    %820 = vmatpush1.msra.mxu0 0.0
    %821 = vmatprep.subr.mxu0 0.0
    %822 = vmatpush1.msra.mxu0 0.0
    %823 = vmatprep.subr.mxu0 0.0
    %824 = vmatpush1.msra.mxu0 0.0
    %825 = vmatprep.subr.mxu0 0.0
    %826 = vmatpush1.msra.mxu0 0.0
    %827 = vmatprep.subr.mxu0 0.0
    %828 = vmatpush1.msra.mxu0 0.0
    %829 = vmatprep.subr.mxu0 0.0
    %830 = vmatpush1.msra.mxu0 0.0
    %831 = vmatprep.subr.mxu0 0.0
    %832 = vmatpush1.msra.mxu0 0.0
    %833 = vmatprep.subr.mxu0 0.0
    %834 = vmatpush1.msra.mxu0 0.0
    %835 = vmatprep.subr.mxu0 0.0
    %836 = vmatpush1.msra.mxu0 0.0
    %837 = vmatprep.subr.mxu0 0.0
    %838 = vmatpush1.msra.mxu0 0.0
    %839 = vmatprep.subr.mxu0 0.0
    %840 = vmatpush1.msra.mxu0 0.0
    %841 = vmatprep.subr.mxu0 0.0
    %842 = vmatpush1.msra.mxu0 0.0
    %843 = vmatprep.subr.mxu0 0.0
    %844 = vmatpush1.msra.mxu0 0.0
    %845 = vmatprep.subr.mxu0 0.0
    %846 = vmatpush1.msra.mxu0 0.0
    %847 = vmatprep.subr.mxu0 0.0
    %848 = vmatpush1.msra.mxu0 0.0
    %849 = vmatprep.mubr.f32.mxu0 0.0
    %850 = vmatmul.mubr.f32.gmra.mrb[0].mxu0 %v763
    %v851 = vpop.f32.mrb[0].mxu0
    %v852 = vadd.f32 %v784, %v851
    %v853 = vpop.f32.mrb[0].mxu0
    %854 = vdwg.mxu0
    %v855 = vmax.f32 %v852, 0.0
    %856 = vadd.xlane.f32.xlu0 %v855
    %v857 = vpop.xlane.xlu0 %856
    %v858 = vmul.f32 %v857, 0.03125
    %v859 = vmul.f32 %v855, %v855
    %860 = vadd.xlane.f32.xlu0 %v859
    %v861 = vpop.xlane.xlu0 %860
    %v862 = vmul.f32 %v861, 0.03125
    %v863 = vmul.f32 %v858, %v858
    %v864 = vsub.f32 %v862, %v863
    %v865 = vadd.f32 %v864, 1e-05
    %v866 = vrsqrt.pop %v865
    %v867 = vlaneseq
    %v868 = vshrl.u32 %v867, 7
    %v869 = vsub.s32 1, %v868
    %v870 = vrot.slane %v780, %v869
    %v871 = vmul.f32 %v866, %v870
    %v872 = vmul.f32 %v855, %v871
    %v873 = vmul.f32 %v858, %v871
    %v874 = vlaneseq
    %v875 = vshrl.u32 %v874, 7
    %v876 = vsub.s32 2, %v875
    %v877 = vrot.slane %v780, %v876
    %v878 = vsub.f32 %v877, %v873
    %v879 = vadd.f32 %v872, %v878
    %v880 = vld [vmem:[#allocation12] sm:$0xff]
    %v881 = vld [vmem:[#allocation12 + $0x8] sm:$0xff]
    %v882 = vld [vmem:[#allocation12 + $0x10] sm:$0xff]
    %v883 = vld [vmem:[#allocation12 + $0x18] sm:$0xff]
    %v884 = vld [vmem:[#allocation12 + $0x20] sm:$0xff]
    %v885 = vld [vmem:[#allocation12 + $0x28] sm:$0xff]
    %v886 = vld [vmem:[#allocation12 + $0x30] sm:$0xff]
    %v887 = vld [vmem:[#allocation12 + $0x38] sm:$0xff]
    %v888 = vld [vmem:[#allocation12 + $0x40] sm:$0xff]
    %v889 = vld [vmem:[#allocation12 + $0x48] sm:$0xff]
    %v890 = vld [vmem:[#allocation12 + $0x50] sm:$0xff]
    %v891 = vld [vmem:[#allocation12 + $0x58] sm:$0xff]
    %v892 = vld [vmem:[#allocation12 + $0x60] sm:$0xff]
    %v893 = vld [vmem:[#allocation12 + $0x68] sm:$0xff]
    %v894 = vld [vmem:[#allocation12 + $0x70] sm:$0xff]
    %v895 = vld [vmem:[#allocation12 + $0x78] sm:$0xff]
    %v896 = vld [vmem:[%s14] sm:$0x7]
    %v897 = vlaneseq
    %v898 = vshrl.u32 %v897, 7
    %v899 = vsub.s32 0, %v898
    %v900 = vrot.slane %v896, %v899
    %901 = vmatprep.subr.mxu0 0.0
    %902 = vmatpush1.msra.mxu0 %v880
    %903 = vmatprep.subr.mxu0 0.0
    %904 = vmatpush1.msra.mxu0 %v881
    %905 = vmatprep.subr.mxu0 0.0
    %906 = vmatpush1.msra.mxu0 %v882
    %907 = vmatprep.subr.mxu0 0.0
    %908 = vmatpush1.msra.mxu0 %v883
    %909 = vmatprep.subr.mxu0 0.0
    %910 = vmatpush1.msra.mxu0 %v884
    %911 = vmatprep.subr.mxu0 0.0
    %912 = vmatpush1.msra.mxu0 %v885
    %913 = vmatprep.subr.mxu0 0.0
    %914 = vmatpush1.msra.mxu0 %v886
    %915 = vmatprep.subr.mxu0 0.0
    %916 = vmatpush1.msra.mxu0 %v887
    %917 = vmatprep.subr.mxu0 0.0
    %918 = vmatpush1.msra.mxu0 %v888
    %919 = vmatprep.subr.mxu0 0.0
    %920 = vmatpush1.msra.mxu0 %v889
    %921 = vmatprep.subr.mxu0 0.0
    %922 = vmatpush1.msra.mxu0 %v890
    %923 = vmatprep.subr.mxu0 0.0
    %924 = vmatpush1.msra.mxu0 %v891
    %925 = vmatprep.subr.mxu0 0.0
    %926 = vmatpush1.msra.mxu0 %v892
    %927 = vmatprep.subr.mxu0 0.0
    %928 = vmatpush1.msra.mxu0 %v893
    %929 = vmatprep.subr.mxu0 0.0
    %930 = vmatpush1.msra.mxu0 %v894
    %931 = vmatprep.subr.mxu0 0.0
    %932 = vmatpush1.msra.mxu0 %v895
    %933 = vmatprep.subr.mxu0 0.0
    %934 = vmatpush1.msra.mxu0 0.0
    %935 = vmatprep.subr.mxu0 0.0
    %936 = vmatpush1.msra.mxu0 0.0
    %937 = vmatprep.subr.mxu0 0.0
    %938 = vmatpush1.msra.mxu0 0.0
    %939 = vmatprep.subr.mxu0 0.0
    %940 = vmatpush1.msra.mxu0 0.0
    %941 = vmatprep.subr.mxu0 0.0
    %942 = vmatpush1.msra.mxu0 0.0
    %943 = vmatprep.subr.mxu0 0.0
    %944 = vmatpush1.msra.mxu0 0.0
    %945 = vmatprep.subr.mxu0 0.0
    %946 = vmatpush1.msra.mxu0 0.0
    %947 = vmatprep.subr.mxu0 0.0
    %948 = vmatpush1.msra.mxu0 0.0
    %949 = vmatprep.subr.mxu0 0.0
    %950 = vmatpush1.msra.mxu0 0.0
    %951 = vmatprep.subr.mxu0 0.0
    %952 = vmatpush1.msra.mxu0 0.0
    %953 = vmatprep.subr.mxu0 0.0
    %954 = vmatpush1.msra.mxu0 0.0
    %955 = vmatprep.subr.mxu0 0.0
    %956 = vmatpush1.msra.mxu0 0.0
    %957 = vmatprep.subr.mxu0 0.0
    %958 = vmatpush1.msra.mxu0 0.0
    %959 = vmatprep.subr.mxu0 0.0
    %960 = vmatpush1.msra.mxu0 0.0
    %961 = vmatprep.subr.mxu0 0.0
    %962 = vmatpush1.msra.mxu0 0.0
    %963 = vmatprep.subr.mxu0 0.0
    %964 = vmatpush1.msra.mxu0 0.0
    %965 = vmatprep.mubr.f32.mxu0 0.0
    %966 = vmatmul.mubr.f32.gmra.mrb[0].mxu0 %v879
    %v967 = vpop.f32.mrb[0].mxu0
    %v968 = vadd.f32 %v900, %v967
    %v969 = vpop.f32.mrb[0].mxu0
    %970 = vdwg.mxu0
    %v971 = vmax.f32 %v968, 0.0
    %972 = vadd.xlane.f32.xlu0 %v971
    %v973 = vpop.xlane.xlu0 %972
    %v974 = vmul.f32 %v973, 0.03125
    %v975 = vmul.f32 %v971, %v971
    %976 = vadd.xlane.f32.xlu0 %v975
    %v977 = vpop.xlane.xlu0 %976
    %v978 = vmul.f32 %v977, 0.03125
    %v979 = vmul.f32 %v974, %v974
    %v980 = vsub.f32 %v978, %v979
    %v981 = vadd.f32 %v980, 1e-05
    %v982 = vrsqrt.pop %v981
    %v983 = vlaneseq
    %v984 = vshrl.u32 %v983, 7
    %v985 = vsub.s32 1, %v984
    %v986 = vrot.slane %v896, %v985
    %v987 = vmul.f32 %v982, %v986
    %v988 = vmul.f32 %v971, %v987
    %v989 = vmul.f32 %v974, %v987
    %v990 = vlaneseq
    %v991 = vshrl.u32 %v990, 7
    %v992 = vsub.s32 2, %v991
    %v993 = vrot.slane %v896, %v992
    %v994 = vsub.f32 %v993, %v989
    %v995 = vadd.f32 %v988, %v994
    %v996 = vld [vmem:[#allocation13] sm:$0xff]
    %v997 = vld [vmem:[#allocation13 + $0x8] sm:$0xff]
    %v998 = vld [vmem:[#allocation13 + $0x10] sm:$0xff]
    %v999 = vld [vmem:[#allocation13 + $0x18] sm:$0xff]
    %v1000 = vld [vmem:[#allocation13 + $0x20] sm:$0xff]
    %v1001 = vld [vmem:[#allocation13 + $0x28] sm:$0xff]
    %v1002 = vld [vmem:[#allocation13 + $0x30] sm:$0xff]
    %v1003 = vld [vmem:[#allocation13 + $0x38] sm:$0xff]
    %v1004 = vld [vmem:[#allocation13 + $0x40] sm:$0xff]
    %v1005 = vld [vmem:[#allocation13 + $0x48] sm:$0xff]
    %v1006 = vld [vmem:[#allocation13 + $0x50] sm:$0xff]
    %v1007 = vld [vmem:[#allocation13 + $0x58] sm:$0xff]
    %v1008 = vld [vmem:[#allocation13 + $0x60] sm:$0xff]
    %v1009 = vld [vmem:[#allocation13 + $0x68] sm:$0xff]
    %v1010 = vld [vmem:[#allocation13 + $0x70] sm:$0xff]
    %v1011 = vld [vmem:[#allocation13 + $0x78] sm:$0xff]
    %v1012 = vld [vmem:[%s16] sm:$0x7]
    %v1013 = vlaneseq
    %v1014 = vshrl.u32 %v1013, 7
    %v1015 = vsub.s32 0, %v1014
    %v1016 = vrot.slane %v1012, %v1015
    %1017 = vmatprep.subr.mxu0 0.0
    %1018 = vmatpush1.msra.mxu0 %v996
    %1019 = vmatprep.subr.mxu0 0.0
    %1020 = vmatpush1.msra.mxu0 %v997
    %1021 = vmatprep.subr.mxu0 0.0
    %1022 = vmatpush1.msra.mxu0 %v998
    %1023 = vmatprep.subr.mxu0 0.0
    %1024 = vmatpush1.msra.mxu0 %v999
    %1025 = vmatprep.subr.mxu0 0.0
    %1026 = vmatpush1.msra.mxu0 %v1000
    %1027 = vmatprep.subr.mxu0 0.0
    %1028 = vmatpush1.msra.mxu0 %v1001
    %1029 = vmatprep.subr.mxu0 0.0
    %1030 = vmatpush1.msra.mxu0 %v1002
    %1031 = vmatprep.subr.mxu0 0.0
    %1032 = vmatpush1.msra.mxu0 %v1003
    %1033 = vmatprep.subr.mxu0 0.0
    %1034 = vmatpush1.msra.mxu0 %v1004
    %1035 = vmatprep.subr.mxu0 0.0
    %1036 = vmatpush1.msra.mxu0 %v1005
    %1037 = vmatprep.subr.mxu0 0.0
    %1038 = vmatpush1.msra.mxu0 %v1006
    %1039 = vmatprep.subr.mxu0 0.0
    %1040 = vmatpush1.msra.mxu0 %v1007
    %1041 = vmatprep.subr.mxu0 0.0
    %1042 = vmatpush1.msra.mxu0 %v1008
    %1043 = vmatprep.subr.mxu0 0.0
    %1044 = vmatpush1.msra.mxu0 %v1009
    %1045 = vmatprep.subr.mxu0 0.0
    %1046 = vmatpush1.msra.mxu0 %v1010
    %1047 = vmatprep.subr.mxu0 0.0
    %1048 = vmatpush1.msra.mxu0 %v1011
    %1049 = vmatprep.subr.mxu0 0.0
    %1050 = vmatpush1.msra.mxu0 0.0
    %1051 = vmatprep.subr.mxu0 0.0
    %1052 = vmatpush1.msra.mxu0 0.0
    %1053 = vmatprep.subr.mxu0 0.0
    %1054 = vmatpush1.msra.mxu0 0.0
    %1055 = vmatprep.subr.mxu0 0.0
    %1056 = vmatpush1.msra.mxu0 0.0
    %1057 = vmatprep.subr.mxu0 0.0
    %1058 = vmatpush1.msra.mxu0 0.0
    %1059 = vmatprep.subr.mxu0 0.0
    %1060 = vmatpush1.msra.mxu0 0.0
    %1061 = vmatprep.subr.mxu0 0.0
    %1062 = vmatpush1.msra.mxu0 0.0
    %1063 = vmatprep.subr.mxu0 0.0
    %1064 = vmatpush1.msra.mxu0 0.0
    %1065 = vmatprep.subr.mxu0 0.0
    %1066 = vmatpush1.msra.mxu0 0.0
    %1067 = vmatprep.subr.mxu0 0.0
    %1068 = vmatpush1.msra.mxu0 0.0
    %1069 = vmatprep.subr.mxu0 0.0
    %1070 = vmatpush1.msra.mxu0 0.0
    %1071 = vmatprep.subr.mxu0 0.0
    %1072 = vmatpush1.msra.mxu0 0.0
    %1073 = vmatprep.subr.mxu0 0.0
    %1074 = vmatpush1.msra.mxu0 0.0
    %1075 = vmatprep.subr.mxu0 0.0
    %1076 = vmatpush1.msra.mxu0 0.0
    %1077 = vmatprep.subr.mxu0 0.0
    %1078 = vmatpush1.msra.mxu0 0.0
    %1079 = vmatprep.subr.mxu0 0.0
    %1080 = vmatpush1.msra.mxu0 0.0
    %1081 = vmatprep.mubr.f32.mxu0 0.0
    %1082 = vmatmul.mubr.f32.gmra.mrb[0].mxu0 %v995
    %v1083 = vpop.f32.mrb[0].mxu0
    %v1084 = vadd.f32 %v1016, %v1083
    %v1085 = vpop.f32.mrb[0].mxu0
    %1086 = vdwg.mxu0
    %v1087 = vmax.f32 %v1084, 0.0
    %1088 = vadd.xlane.f32.xlu0 %v1087
    %v1089 = vpop.xlane.xlu0 %1088
    %v1090 = vmul.f32 %v1089, 0.03125
    %v1091 = vmul.f32 %v1087, %v1087
    %1092 = vadd.xlane.f32.xlu0 %v1091
    %v1093 = vpop.xlane.xlu0 %1092
    %v1094 = vmul.f32 %v1093, 0.03125
    %v1095 = vmul.f32 %v1090, %v1090
    %v1096 = vsub.f32 %v1094, %v1095
    %v1097 = vadd.f32 %v1096, 1e-05
    %v1098 = vrsqrt.pop %v1097
    %v1099 = vlaneseq
    %v1100 = vshrl.u32 %v1099, 7
    %v1101 = vsub.s32 1, %v1100
    %v1102 = vrot.slane %v1012, %v1101
    %v1103 = vmul.f32 %v1098, %v1102
    %v1104 = vmul.f32 %v1087, %v1103
    %v1105 = vmul.f32 %v1090, %v1103
    %v1106 = vlaneseq
    %v1107 = vshrl.u32 %v1106, 7
    %v1108 = vsub.s32 2, %v1107
    %v1109 = vrot.slane %v1012, %v1108
    %v1110 = vsub.f32 %v1109, %v1105
    %v1111 = vadd.f32 %v1104, %v1110
    %v1112 = vld [vmem:[#allocation15] sm:$0xff]
    %v1113 = vld [vmem:[#allocation15 + $0x8] sm:$0xff]
    %v1114 = vld [vmem:[#allocation15 + $0x10] sm:$0xff]
    %v1115 = vld [vmem:[#allocation15 + $0x18] sm:$0xff]
    %v1116 = vld [vmem:[#allocation15 + $0x20] sm:$0xff]
    %v1117 = vld [vmem:[#allocation15 + $0x28] sm:$0xff]
    %v1118 = vld [vmem:[#allocation15 + $0x30] sm:$0xff]
    %v1119 = vld [vmem:[#allocation15 + $0x38] sm:$0xff]
    %v1120 = vld [vmem:[#allocation15 + $0x40] sm:$0xff]
    %v1121 = vld [vmem:[#allocation15 + $0x48] sm:$0xff]
    %v1122 = vld [vmem:[#allocation15 + $0x50] sm:$0xff]
    %v1123 = vld [vmem:[#allocation15 + $0x58] sm:$0xff]
    %v1124 = vld [vmem:[#allocation15 + $0x60] sm:$0xff]
    %v1125 = vld [vmem:[#allocation15 + $0x68] sm:$0xff]
    %v1126 = vld [vmem:[#allocation15 + $0x70] sm:$0xff]
    %v1127 = vld [vmem:[#allocation15 + $0x78] sm:$0xff]
    %v1128 = vld [vmem:[%s18] sm:$0x7]
    %v1129 = vlaneseq
    %v1130 = vshrl.u32 %v1129, 7
    %v1131 = vsub.s32 0, %v1130
    %v1132 = vrot.slane %v1128, %v1131
    %1133 = vmatprep.subr.mxu0 0.0
    %1134 = vmatpush1.msra.mxu0 %v1112
    %1135 = vmatprep.subr.mxu0 0.0
    %1136 = vmatpush1.msra.mxu0 %v1113
    %1137 = vmatprep.subr.mxu0 0.0
    %1138 = vmatpush1.msra.mxu0 %v1114
    %1139 = vmatprep.subr.mxu0 0.0
    %1140 = vmatpush1.msra.mxu0 %v1115
    %1141 = vmatprep.subr.mxu0 0.0
    %1142 = vmatpush1.msra.mxu0 %v1116
    %1143 = vmatprep.subr.mxu0 0.0
    %1144 = vmatpush1.msra.mxu0 %v1117
    %1145 = vmatprep.subr.mxu0 0.0
    %1146 = vmatpush1.msra.mxu0 %v1118
    %1147 = vmatprep.subr.mxu0 0.0
    %1148 = vmatpush1.msra.mxu0 %v1119
    %1149 = vmatprep.subr.mxu0 0.0
    %1150 = vmatpush1.msra.mxu0 %v1120
    %1151 = vmatprep.subr.mxu0 0.0
    %1152 = vmatpush1.msra.mxu0 %v1121
    %1153 = vmatprep.subr.mxu0 0.0
    %1154 = vmatpush1.msra.mxu0 %v1122
    %1155 = vmatprep.subr.mxu0 0.0
    %1156 = vmatpush1.msra.mxu0 %v1123
    %1157 = vmatprep.subr.mxu0 0.0
    %1158 = vmatpush1.msra.mxu0 %v1124
    %1159 = vmatprep.subr.mxu0 0.0
    %1160 = vmatpush1.msra.mxu0 %v1125
    %1161 = vmatprep.subr.mxu0 0.0
    %1162 = vmatpush1.msra.mxu0 %v1126
    %1163 = vmatprep.subr.mxu0 0.0
    %1164 = vmatpush1.msra.mxu0 %v1127
    %1165 = vmatprep.subr.mxu0 0.0
    %1166 = vmatpush1.msra.mxu0 0.0
    %1167 = vmatprep.subr.mxu0 0.0
    %1168 = vmatpush1.msra.mxu0 0.0
    %1169 = vmatprep.subr.mxu0 0.0
    %1170 = vmatpush1.msra.mxu0 0.0
    %1171 = vmatprep.subr.mxu0 0.0
    %1172 = vmatpush1.msra.mxu0 0.0
    %1173 = vmatprep.subr.mxu0 0.0
    %1174 = vmatpush1.msra.mxu0 0.0
    %1175 = vmatprep.subr.mxu0 0.0
    %1176 = vmatpush1.msra.mxu0 0.0
    %1177 = vmatprep.subr.mxu0 0.0
    %1178 = vmatpush1.msra.mxu0 0.0
    %1179 = vmatprep.subr.mxu0 0.0
    %1180 = vmatpush1.msra.mxu0 0.0
    %1181 = vmatprep.subr.mxu0 0.0
    %1182 = vmatpush1.msra.mxu0 0.0
    %1183 = vmatprep.subr.mxu0 0.0
    %1184 = vmatpush1.msra.mxu0 0.0
    %1185 = vmatprep.subr.mxu0 0.0
    %1186 = vmatpush1.msra.mxu0 0.0
    %1187 = vmatprep.subr.mxu0 0.0
    %1188 = vmatpush1.msra.mxu0 0.0
    %1189 = vmatprep.subr.mxu0 0.0
    %1190 = vmatpush1.msra.mxu0 0.0
    %1191 = vmatprep.subr.mxu0 0.0
    %1192 = vmatpush1.msra.mxu0 0.0
    %1193 = vmatprep.subr.mxu0 0.0
    %1194 = vmatpush1.msra.mxu0 0.0
    %1195 = vmatprep.subr.mxu0 0.0
    %1196 = vmatpush1.msra.mxu0 0.0
    %1197 = vmatprep.mubr.f32.mxu0 0.0
    %1198 = vmatmul.mubr.f32.gmra.mrb[0].mxu0 %v1111
    %v1199 = vpop.f32.mrb[0].mxu0
    %v1200 = vadd.f32 %v1132, %v1199
    %v1201 = vpop.f32.mrb[0].mxu0
    %1202 = vdwg.mxu0
    %v1203 = vmax.f32 %v1200, 0.0
    %1204 = vadd.xlane.f32.xlu0 %v1203
    %v1205 = vpop.xlane.xlu0 %1204
    %v1206 = vmul.f32 %v1205, 0.03125
    %v1207 = vmul.f32 %v1203, %v1203
    %1208 = vadd.xlane.f32.xlu0 %v1207
    %v1209 = vpop.xlane.xlu0 %1208
    %v1210 = vmul.f32 %v1209, 0.03125
    %v1211 = vmul.f32 %v1206, %v1206
    %v1212 = vsub.f32 %v1210, %v1211
    %v1213 = vadd.f32 %v1212, 1e-05
    %v1214 = vrsqrt.pop %v1213
    %v1215 = vlaneseq
    %v1216 = vshrl.u32 %v1215, 7
    %v1217 = vsub.s32 1, %v1216
    %v1218 = vrot.slane %v1128, %v1217
    %v1219 = vmul.f32 %v1214, %v1218
    %v1220 = vmul.f32 %v1203, %v1219
    %v1221 = vmul.f32 %v1206, %v1219
    %v1222 = vlaneseq
    %v1223 = vshrl.u32 %v1222, 7
    %v1224 = vsub.s32 2, %v1223
    %v1225 = vrot.slane %v1128, %v1224
    %v1226 = vsub.f32 %v1225, %v1221
    %v1227 = vadd.f32 %v1220, %v1226
    %v1228 = vadd.f32 %v763, %v1227
    %v1229 = vmax.f32 %v1228, 0.0
    %v1230 = vld [vmem:[#allocation16] sm:$0xff]
    %v1231 = vld [vmem:[#allocation16 + $0x8] sm:$0xff]
    %v1232 = vld [vmem:[#allocation16 + $0x10] sm:$0xff]
    %v1233 = vld [vmem:[#allocation16 + $0x18] sm:$0xff]
    %v1234 = vld [vmem:[#allocation16 + $0x20] sm:$0xff]
    %v1235 = vld [vmem:[#allocation16 + $0x28] sm:$0xff]
    %v1236 = vld [vmem:[#allocation16 + $0x30] sm:$0xff]
    %v1237 = vld [vmem:[#allocation16 + $0x38] sm:$0xff]
    %v1238 = vld [vmem:[#allocation16 + $0x40] sm:$0xff]
    %v1239 = vld [vmem:[#allocation16 + $0x48] sm:$0xff]
    %v1240 = vld [vmem:[#allocation16 + $0x50] sm:$0xff]
    %v1241 = vld [vmem:[#allocation16 + $0x58] sm:$0xff]
    %v1242 = vld [vmem:[#allocation16 + $0x60] sm:$0xff]
    %v1243 = vld [vmem:[#allocation16 + $0x68] sm:$0xff]
    %v1244 = vld [vmem:[#allocation16 + $0x70] sm:$0xff]
    %v1245 = vld [vmem:[#allocation16 + $0x78] sm:$0xff]
    %v1246 = vld [vmem:[%s20] sm:$0x1]
    %v1248 = vlaneseq
    %v1249 = vshrl.u32 %v1248, 7
    %v1250 = vsub.s32 0, %v1249
    %v1251 = vrot.slane %v1246, %v1250
    %1253 = vmatprep.subr.mxu0 0.0
    %1254 = vmatpush1.msra.mxu0 %v1230
    %1255 = vmatprep.subr.mxu0 0.0
    %1256 = vmatpush1.msra.mxu0 %v1231
    %1257 = vmatprep.subr.mxu0 0.0
    %1258 = vmatpush1.msra.mxu0 %v1232
    %1259 = vmatprep.subr.mxu0 0.0
    %1260 = vmatpush1.msra.mxu0 %v1233
    %1261 = vmatprep.subr.mxu0 0.0
    %1262 = vmatpush1.msra.mxu0 %v1234
    %1263 = vmatprep.subr.mxu0 0.0
    %1264 = vmatpush1.msra.mxu0 %v1235
    %1265 = vmatprep.subr.mxu0 0.0
    %1266 = vmatpush1.msra.mxu0 %v1236
    %1267 = vmatprep.subr.mxu0 0.0
    %1268 = vmatpush1.msra.mxu0 %v1237
    %1269 = vmatprep.subr.mxu0 0.0
    %1270 = vmatpush1.msra.mxu0 %v1238
    %1271 = vmatprep.subr.mxu0 0.0
    %1272 = vmatpush1.msra.mxu0 %v1239
    %1273 = vmatprep.subr.mxu0 0.0
    %1274 = vmatpush1.msra.mxu0 %v1240
    %1275 = vmatprep.subr.mxu0 0.0
    %1276 = vmatpush1.msra.mxu0 %v1241
    %1277 = vmatprep.subr.mxu0 0.0
    %1278 = vmatpush1.msra.mxu0 %v1242
    %1279 = vmatprep.subr.mxu0 0.0
    %1280 = vmatpush1.msra.mxu0 %v1243
    %1281 = vmatprep.subr.mxu0 0.0
    %1282 = vmatpush1.msra.mxu0 %v1244
    %1283 = vmatprep.subr.mxu0 0.0
    %1284 = vmatpush1.msra.mxu0 %v1245
    %1285 = vmatprep.subr.mxu0 0.0
    %1286 = vmatpush1.msra.mxu0 0.0
    %1287 = vmatprep.subr.mxu0 0.0
    %1288 = vmatpush1.msra.mxu0 0.0
    %1289 = vmatprep.subr.mxu0 0.0
    %1290 = vmatpush1.msra.mxu0 0.0
    %1291 = vmatprep.subr.mxu0 0.0
    %1292 = vmatpush1.msra.mxu0 0.0
    %1293 = vmatprep.subr.mxu0 0.0
    %1294 = vmatpush1.msra.mxu0 0.0
    %1295 = vmatprep.subr.mxu0 0.0
    %1296 = vmatpush1.msra.mxu0 0.0
    %1297 = vmatprep.subr.mxu0 0.0
    %1298 = vmatpush1.msra.mxu0 0.0
    %1299 = vmatprep.subr.mxu0 0.0
    %1300 = vmatpush1.msra.mxu0 0.0
    %1301 = vmatprep.subr.mxu0 0.0
    %1302 = vmatpush1.msra.mxu0 0.0
    %1303 = vmatprep.subr.mxu0 0.0
    %1304 = vmatpush1.msra.mxu0 0.0
    %1305 = vmatprep.subr.mxu0 0.0
    %1306 = vmatpush1.msra.mxu0 0.0
    %1307 = vmatprep.subr.mxu0 0.0
    %1308 = vmatpush1.msra.mxu0 0.0
    %1309 = vmatprep.subr.mxu0 0.0
    %1310 = vmatpush1.msra.mxu0 0.0
    %1311 = vmatprep.subr.mxu0 0.0
    %1312 = vmatpush1.msra.mxu0 0.0
    %1313 = vmatprep.subr.mxu0 0.0
    %1314 = vmatpush1.msra.mxu0 0.0
    %1315 = vmatprep.subr.mxu0 0.0
    %1316 = vmatpush1.msra.mxu0 0.0
    %1317 = vmatprep.mubr.f32.mxu0 0.0
    %1318 = vmatmul.mubr.f32.gmra.mrb[0].mxu0 %v1229
    %v1319 = vpop.f32.mrb[0].mxu0
    %v1320 = vadd.f32 %v1251, %v1319
    %v1321 = vpop.f32.mrb[0].mxu0
    %1322 = vdwg.mxu0
    %1323 = vst [vmem:[%s21] sm:$0xff] %v1320
    // Predicated region
    $region126: #{_lambda_.1} parent=1 // pred_check
      _
    $region127: #{_lambda_.1} parent=1 // pred_check_branch
      %1325 = sbr.rel (0) target = $region129
    $region128: #{_lambda_.1} parent=1 // pred_region
      _
    $region129: #{_lambda_.1} parent=1 // pred_fallthru
      _
    // Predicated region
    $region130: #{_lambda_.1} parent=1 // pred_check
      _
    $region131: #{_lambda_.1} parent=1 // pred_check_branch
      %1327 = sbr.rel (0) target = $region133
    $region132: #{_lambda_.1} parent=1 // pred_region
      _
    $region133: #{_lambda_.1} parent=1 // pred_fallthru
      _
    %1328 = vsyncpa [#allocation3], 1
    %1329 = vsyncpa [#allocation5], 1
    %1330 = vsyncpa [#allocation8], 1
    %1331 = vsyncpa [#allocation11], 1
    %1332 = vsyncpa [#allocation14], 1
    %1333 = vsyncpa [#allocation17], 1

</llo_original>
